<compile_context>
chip_gen: v6e
topology: v6e:2x2x1
jax: 0.10.0
libtpu: 0.0.40
codegen_flags: <defaults>
</compile_context>

<pallas_src>
import functools

import jax
import jax.numpy as jnp
from jax import lax
from jax.experimental import pallas as pl
from jax.experimental.pallas import tpu as pltpu


def _flash_attn_kernel(q_ref, k_ref, v_ref, out_ref,
                       m_ref, l_ref, acc_ref, *, scale):
    """One (batch, q-tile, k-tile) grid step.

    q_ref  : (1, tq, C)   bf16
    k_ref  : (1, tk, C)   bf16
    v_ref  : (1, tk, Co)  bf16
    out_ref: (1, Co, tq)  f32   (lane-dense: tq on the lane axis)
    m_ref, l_ref : (tq, 1) f32 scratch (running max / running sum)
    acc_ref      : (tq, Co) f32 scratch (unnormalized context accumulator)
    """
    ki = pl.program_id(2)

    @pl.when(ki == 0)
    def _():
        m_ref[...] = jnp.full(m_ref.shape, -jnp.inf, dtype=m_ref.dtype)
        l_ref[...] = jnp.zeros(l_ref.shape, dtype=l_ref.dtype)
        acc_ref[...] = jnp.zeros(acc_ref.shape, dtype=acc_ref.dtype)

    q = q_ref[0]                       # (tq, C)  bf16
    k = k_ref[0]                       # (tk, C)  bf16
    v = v_ref[0]                       # (tk, Co) bf16

    # sim tile = Q @ K^T without an explicit transpose: contract channel dims.
    s = lax.dot_general(q, k,
                        dimension_numbers=(((1,), (1,)), ((), ())),
                        preferred_element_type=jnp.float32)       # (tq, tk) f32
    s = s * scale                                                  # matmul_norm

    # Online softmax update (all f32).
    m_prev = m_ref[...]
    m_new = jnp.maximum(m_prev, jnp.max(s, axis=-1, keepdims=True))
    alpha = jnp.exp(m_prev - m_new)
    p = jnp.exp(s - m_new)                                         # (tq, tk)

    l_ref[...] = alpha * l_ref[...] + jnp.sum(p, axis=-1, keepdims=True)
    acc_ref[...] = alpha * acc_ref[...] + jnp.dot(
        p.astype(v.dtype), v, preferred_element_type=jnp.float32)  # (tq, Co)
    m_ref[...] = m_new

    @pl.when(ki == pl.num_programs(2) - 1)
    def _():
        inv_l = pl.reciprocal(l_ref[...], approx=True)             # (tq, 1)
        ctx = acc_ref[...] * inv_l                                 # (tq, Co)
        # Single small XLU transpose -> lane-dense (Co, tq) store.
        out_ref[0] = ctx.T.astype(out_ref.dtype)


def _pick_tile(n, pref=128):
    """Largest clean tile: `pref` if it divides n, else the full extent."""
    return pref if n % pref == 0 else n


def self_attention_block(query_feats, key_feats, params, *,
                         channels, matmul_norm=True):
    """query_feats: (B, Cq_in, Hq, Wq) NCHW; key_feats: (B, Ck_in, Hk, Wk).

    Returns context of shape (B, out_channels, Hq, Wq) — same semantics as the
    PyTorch module (with_out=False, no downsampling, plain Conv2d projections).
    """
    B, Cq_in, Hq, Wq = query_feats.shape
    _, Ck_in, Hk, Wk = key_feats.shape
    Nq, Nk = Hq * Wq, Hk * Wk

    wq, bq = params["wq"], params["bq"]          # (Cq_in, C), (1, C)
    wk, bk = params["wk"], params["bk"]          # (Ck_in, C), (1, C)
    wv, bv = params["wv"], params["bv"]          # (Ck_in, Co), (1, Co)
    C = wq.shape[1]
    Co = wv.shape[1]

    # NCHW -> (B, N, Cin)
    qf = jnp.transpose(query_feats, (0, 2, 3, 1)).reshape(B, Nq, Cq_in)
    kf = jnp.transpose(key_feats, (0, 2, 3, 1)).reshape(B, Nk, Ck_in)

    # Tiny 1x1-conv projections: plain XLA matmuls (hoisted out of the kernel),
    # then cast to bf16 for the MXU (accumulation stays f32 in-kernel).
    q = (qf @ wq + bq).astype(jnp.bfloat16)      # (B, Nq, C)
    k = (kf @ wk + bk).astype(jnp.bfloat16)      # (B, Nk, C)
    v = (kf @ wv + bv).astype(jnp.bfloat16)      # (B, Nk, Co)

    scale = (channels ** -0.5) if matmul_norm else 1.0
    tq = _pick_tile(Nq)
    tk = _pick_tile(Nk)
    # TODO(synk): if Nk is not a multiple of the preferred tile we fall back to
    # a single full-extent key tile; a masked-padding path would be needed for
    # very large, non-128-multiple key lengths.

    kernel = functools.partial(_flash_attn_kernel, scale=scale)

    out = pl.pallas_call(
        kernel,
        out_shape=jax.ShapeDtypeStruct((B, Co, Nq), jnp.float32),
        grid_spec=pltpu.PrefetchScalarGridSpec(
            num_scalar_prefetch=0,
            grid=(B, Nq // tq, Nk // tk),
            in_specs=[
                pl.BlockSpec((1, tq, C), lambda b, qi, ki: (b, qi, 0)),
                pl.BlockSpec((1, tk, C), lambda b, qi, ki: (b, ki, 0)),
                pl.BlockSpec((1, tk, Co), lambda b, qi, ki: (b, ki, 0)),
            ],
            out_specs=pl.BlockSpec((1, Co, tq), lambda b, qi, ki: (b, 0, qi)),
            scratch_shapes=[
                pltpu.VMEM((tq, 1), jnp.float32),    # running max m
                pltpu.VMEM((tq, 1), jnp.float32),    # running sum l
                pltpu.VMEM((tq, Co), jnp.float32),   # context accumulator
            ],
        ),
        compiler_params=pltpu.CompilerParams(
            dimension_semantics=("parallel", "parallel", "arbitrary"),
            vmem_limit_bytes=32 * 1024 * 1024,
        ),
    )(q, k, v)

    # (B, Co, Nq) is already the module's output layout -> just reshape.
    return out.reshape(B, Co, Hq, Wq)


def _reference(query_feats, key_feats, params, *, channels, matmul_norm=True):
    """Pure-JAX f32 reference mirroring the PyTorch forward."""
    B, Cq_in, Hq, Wq = query_feats.shape
    _, Ck_in, Hk, Wk = key_feats.shape
    qf = jnp.transpose(query_feats, (0, 2, 3, 1)).reshape(B, Hq * Wq, Cq_in)
    kf = jnp.transpose(key_feats, (0, 2, 3, 1)).reshape(B, Hk * Wk, Ck_in)
    q = qf @ params["wq"] + params["bq"]
    k = kf @ params["wk"] + params["bk"]
    v = kf @ params["wv"] + params["bv"]
    sim = jnp.einsum("bqc,bkc->bqk", q, k)
    if matmul_norm:
        sim = (channels ** -0.5) * sim
    sim = jax.nn.softmax(sim, axis=-1)
    ctx = jnp.einsum("bqk,bkc->bqc", sim, v)
    Co = params["wv"].shape[1]
    return jnp.transpose(ctx, (0, 2, 1)).reshape(B, Co, Hq, Wq)


if __name__ == "__main__":
    # Module hyperparameters (small demo, but tiles/grid exercise the real path)
    key_in_channels = 4
    query_in_channels = 4
    channels = 32
    out_channels = 16
    B, H, W = 2, 16, 16          # Nq = Nk = 256 -> grid (2, 2, 2)

    key = jax.random.PRNGKey(0)
    k1, k2, k3, k4, k5, k6, k7, k8 = jax.random.split(key, 8)

    # Deterministic synthetic 1x1-conv parameters (weight stored as (Cin, Cout))
    params = {
        "wq": 0.1 * jax.random.normal(k1, (query_in_channels, channels), jnp.float32),
        "bq": 0.05 * jax.random.normal(k2, (1, channels), jnp.float32),
        "wk": 0.1 * jax.random.normal(k3, (key_in_channels, channels), jnp.float32),
        "bk": 0.05 * jax.random.normal(k4, (1, channels), jnp.float32),
        "wv": 0.1 * jax.random.normal(k5, (key_in_channels, out_channels), jnp.float32),
        "bv": 0.05 * jax.random.normal(k6, (1, out_channels), jnp.float32),
    }

    query_feats = jax.random.normal(k7, (B, query_in_channels, H, W), jnp.float32)
    key_feats = jax.random.normal(k8, (B, key_in_channels, H, W), jnp.float32)

    out = self_attention_block(query_feats, key_feats, params,
                               channels=channels, matmul_norm=True)
    out = jax.block_until_ready(out)

    ref = _reference(query_feats, key_feats, params,
                     channels=channels, matmul_norm=True)
    assert out.shape == (B, out_channels, H, W)
    # bf16 MXU operands (f32 accumulation) + approx reciprocal -> looser tol.
    assert jnp.allclose(out, ref, atol=2e-2, rtol=2e-2), (
        "mismatch vs reference: max abs err = "
        f"{float(jnp.max(jnp.abs(out - ref)))}")

    print("KERNEL_OK")
</pallas_src>

<mosaic_0001>
module attributes {stable_mosaic.version = 11 : i64} {
  func.func @_flash_attn_kernel(%arg0: i32, %arg1: i32, %arg2: i32, %arg3: memref<1x128x32xbf16, #tpu.memory_space<vmem>>, %arg4: memref<1x128x32xbf16, #tpu.memory_space<vmem>>, %arg5: memref<1x128x16xbf16, #tpu.memory_space<vmem>>, %arg6: memref<1x16x128xf32, #tpu.memory_space<vmem>>, %arg7: memref<128x1xf32, #tpu.memory_space<vmem>>, %arg8: memref<128x1xf32, #tpu.memory_space<vmem>>, %arg9: memref<128x16xf32, #tpu.memory_space<vmem>>) attributes {dimension_semantics = [#tpu.dimension_semantics<parallel>, #tpu.dimension_semantics<parallel>, #tpu.dimension_semantics<arbitrary>], iteration_bounds = array<i64: 2, 2, 2>, scalar_prefetch = 0 : i64, scratch_operands = 3 : i64, tpu.core_type = #tpu.core_type<tc>, window_params = [{transform_indices = @transform_0, window_bounds = array<i64: 1, 128, 32>}, {transform_indices = @transform_1, window_bounds = array<i64: 1, 128, 32>}, {transform_indices = @transform_2, window_bounds = array<i64: 1, 128, 16>}, {transform_indices = @transform_3, window_bounds = array<i64: 1, 16, 128>}]} {
    %c0_i32 = arith.constant 0 : i32
    %0 = arith.cmpi eq, %arg2, %c0_i32 : i32
    %1 = arith.extui %0 : i1 to i32
    %c0_i32_0 = arith.constant 0 : i32
    %2 = arith.cmpi ne, %1, %c0_i32_0 : i32
    scf.if %2 {
      %cst_26 = arith.constant 0xFF800000 : f32
      %38 = vector.broadcast %cst_26 : f32 to vector<128x1xf32>
      %c0_27 = arith.constant 0 : index
      %c0_28 = arith.constant 0 : index
      %39 = vector.load %arg7[%c0_27, %c0_28] : memref<128x1xf32, #tpu.memory_space<vmem>>, vector<128x1xf32>
      tpu.vector_store %arg7[%c0_27, %c0_28], %38 {strides = array<i32>} : memref<128x1xf32, #tpu.memory_space<vmem>>, vector<128x1xf32>,
      %cst_29 = arith.constant 0.000000e+00 : f32
      %40 = vector.broadcast %cst_29 : f32 to vector<128x1xf32>
      %c0_30 = arith.constant 0 : index
      %c0_31 = arith.constant 0 : index
      %41 = vector.load %arg8[%c0_30, %c0_31] : memref<128x1xf32, #tpu.memory_space<vmem>>, vector<128x1xf32>
      tpu.vector_store %arg8[%c0_30, %c0_31], %40 {strides = array<i32>} : memref<128x1xf32, #tpu.memory_space<vmem>>, vector<128x1xf32>,
      %cst_32 = arith.constant 0.000000e+00 : f32
      %42 = vector.broadcast %cst_32 : f32 to vector<128x16xf32>
      %c0_33 = arith.constant 0 : index
      %c0_34 = arith.constant 0 : index
      %43 = vector.load %arg9[%c0_33, %c0_34] : memref<128x16xf32, #tpu.memory_space<vmem>>, vector<128x16xf32>
      tpu.vector_store %arg9[%c0_33, %c0_34], %42 {strides = array<i32>} : memref<128x16xf32, #tpu.memory_space<vmem>>, vector<128x16xf32>,
    } else {
    }
    %c0 = arith.constant 0 : index
    %c0_1 = arith.constant 0 : index
    %c0_2 = arith.constant 0 : index
    %3 = vector.load %arg3[%c0, %c0_1, %c0_2] : memref<1x128x32xbf16, #tpu.memory_space<vmem>>, vector<1x128x32xbf16>
    %4 = vector.shape_cast %3 : vector<1x128x32xbf16> to vector<128x32xbf16>
    %c0_3 = arith.constant 0 : index
    %c0_4 = arith.constant 0 : index
    %c0_5 = arith.constant 0 : index
    %5 = vector.load %arg4[%c0_3, %c0_4, %c0_5] : memref<1x128x32xbf16, #tpu.memory_space<vmem>>, vector<1x128x32xbf16>
    %6 = vector.shape_cast %5 : vector<1x128x32xbf16> to vector<128x32xbf16>
    %c0_6 = arith.constant 0 : index
    %c0_7 = arith.constant 0 : index
    %c0_8 = arith.constant 0 : index
    %7 = vector.load %arg5[%c0_6, %c0_7, %c0_8] : memref<1x128x16xbf16, #tpu.memory_space<vmem>>, vector<1x128x16xbf16>
    %8 = vector.shape_cast %7 : vector<1x128x16xbf16> to vector<128x16xbf16>
    %cst = arith.constant dense<0.000000e+00> : vector<128x128xf32>
    %9 = tpu.matmul %4, %6, %cst {dimension_numbers = #tpu.dot_dimension_numbers<[1], [1], [0], [0], [0, 0, 1, 0], [], []>} : vector<128x32xbf16>, vector<128x32xbf16>, vector<128x128xf32> -> vector<128x128xf32>
    %cst_9 = arith.constant 0.176776692 : f32
    %10 = vector.broadcast %cst_9 : f32 to vector<128x128xf32>
    %11 = arith.mulf %9, %10 : vector<128x128xf32>
    %c0_10 = arith.constant 0 : index
    %c0_11 = arith.constant 0 : index
    %12 = vector.load %arg7[%c0_10, %c0_11] : memref<128x1xf32, #tpu.memory_space<vmem>>, vector<128x1xf32>
    %cst_12 = arith.constant dense<0xFF800000> : vector<128xf32>
    %13 = vector.multi_reduction <maximumf>, %11, %cst_12 [1] : vector<128x128xf32> to vector<128xf32>
    %14 = vector.shape_cast %13 : vector<128xf32> to vector<128x1xf32>
    %15 = arith.maximumf %12, %14 : vector<128x1xf32>
    %16 = arith.subf %12, %15 : vector<128x1xf32>
    %17 = math.exp %16 : vector<128x1xf32>
    %18 = vector.broadcast %15 : vector<128x1xf32> to vector<128x128xf32>
    %19 = arith.subf %11, %18 : vector<128x128xf32>
    %20 = math.exp %19 : vector<128x128xf32>
    %c0_13 = arith.constant 0 : index
    %c0_14 = arith.constant 0 : index
    %21 = vector.load %arg8[%c0_13, %c0_14] : memref<128x1xf32, #tpu.memory_space<vmem>>, vector<128x1xf32>
    %22 = arith.mulf %17, %21 : vector<128x1xf32>
    %cst_15 = arith.constant dense<0.000000e+00> : vector<128xf32>
    %23 = vector.multi_reduction <add>, %20, %cst_15 [1] : vector<128x128xf32> to vector<128xf32>
    %24 = vector.shape_cast %23 : vector<128xf32> to vector<128x1xf32>
    %25 = arith.addf %22, %24 : vector<128x1xf32>
    %c0_16 = arith.constant 0 : index
    %c0_17 = arith.constant 0 : index
    %26 = vector.load %arg8[%c0_16, %c0_17] : memref<128x1xf32, #tpu.memory_space<vmem>>, vector<128x1xf32>
    tpu.vector_store %arg8[%c0_16, %c0_17], %25 {strides = array<i32>} : memref<128x1xf32, #tpu.memory_space<vmem>>, vector<128x1xf32>,
    %c0_18 = arith.constant 0 : index
    %c0_19 = arith.constant 0 : index
    %27 = vector.load %arg9[%c0_18, %c0_19] : memref<128x16xf32, #tpu.memory_space<vmem>>, vector<128x16xf32>
    %28 = vector.broadcast %17 : vector<128x1xf32> to vector<128x16xf32>
    %29 = arith.mulf %28, %27 : vector<128x16xf32>
    %30 = arith.truncf %20 : vector<128x128xf32> to vector<128x128xbf16>
    %cst_20 = arith.constant dense<0.000000e+00> : vector<128x16xf32>
    %31 = tpu.matmul %30, %8, %cst_20 {dimension_numbers = #tpu.dot_dimension_numbers<[1], [0], [0], [1], [0, 0, 1, 1], [], []>} : vector<128x128xbf16>, vector<128x16xbf16>, vector<128x16xf32> -> vector<128x16xf32>
    %32 = arith.addf %29, %31 : vector<128x16xf32>
    %c0_21 = arith.constant 0 : index
    %c0_22 = arith.constant 0 : index
    %33 = vector.load %arg9[%c0_21, %c0_22] : memref<128x16xf32, #tpu.memory_space<vmem>>, vector<128x16xf32>
    tpu.vector_store %arg9[%c0_21, %c0_22], %32 {strides = array<i32>} : memref<128x16xf32, #tpu.memory_space<vmem>>, vector<128x16xf32>,
    %c0_23 = arith.constant 0 : index
    %c0_24 = arith.constant 0 : index
    %34 = vector.load %arg7[%c0_23, %c0_24] : memref<128x1xf32, #tpu.memory_space<vmem>>, vector<128x1xf32>
    tpu.vector_store %arg7[%c0_23, %c0_24], %15 {strides = array<i32>} : memref<128x1xf32, #tpu.memory_space<vmem>>, vector<128x1xf32>,
    %c1_i32 = arith.constant 1 : i32
    %35 = arith.cmpi eq, %arg2, %c1_i32 : i32
    %36 = arith.extui %35 : i1 to i32
    %c0_i32_25 = arith.constant 0 : i32
    %37 = arith.cmpi ne, %36, %c0_i32_25 : i32
    scf.if %37 {
      %c0_26 = arith.constant 0 : index
      %c0_27 = arith.constant 0 : index
      %38 = vector.load %arg8[%c0_26, %c0_27] : memref<128x1xf32, #tpu.memory_space<vmem>>, vector<128x1xf32>
      %39 = tpu.reciprocal %38 {approx = true} : vector<128x1xf32> -> vector<128x1xf32>
      %c0_28 = arith.constant 0 : index
      %c0_29 = arith.constant 0 : index
      %40 = vector.load %arg9[%c0_28, %c0_29] : memref<128x16xf32, #tpu.memory_space<vmem>>, vector<128x16xf32>
      %41 = vector.broadcast %39 : vector<128x1xf32> to vector<128x16xf32>
      %42 = arith.mulf %40, %41 : vector<128x16xf32>
      %43 = tpu.transpose %42, [1, 0] : vector<128x16xf32> -> vector<16x128xf32>
      %c0_30 = arith.constant 0 : index
      %c0_31 = arith.constant 0 : index
      %c0_32 = arith.constant 0 : index
      %44 = vector.load %arg6[%c0_30, %c0_31, %c0_32] : memref<1x16x128xf32, #tpu.memory_space<vmem>>, vector<1x16x128xf32>
      %45 = vector.shape_cast %44 : vector<1x16x128xf32> to vector<16x128xf32>
      %46 = vector.shape_cast %43 : vector<16x128xf32> to vector<1x16x128xf32>
      tpu.vector_store %arg6[%c0_30, %c0_31, %c0_32], %46 {strides = array<i32>} : memref<1x16x128xf32, #tpu.memory_space<vmem>>, vector<1x16x128xf32>,
    } else {
    }
    return
  }
  func.func @transform_0(%arg0: i32, %arg1: i32, %arg2: i32) -> (i32, i32, i32) {
    %c0_i32 = arith.constant 0 : i32
    %c0_i32_0 = arith.constant 0 : i32
    return %arg0, %arg1, %c0_i32 : i32, i32, i32
  }
  func.func @transform_1(%arg0: i32, %arg1: i32, %arg2: i32) -> (i32, i32, i32) {
    %c0_i32 = arith.constant 0 : i32
    %c0_i32_0 = arith.constant 0 : i32
    return %arg0, %arg2, %c0_i32 : i32, i32, i32
  }
  func.func @transform_2(%arg0: i32, %arg1: i32, %arg2: i32) -> (i32, i32, i32) {
    %c0_i32 = arith.constant 0 : i32
    %c0_i32_0 = arith.constant 0 : i32
    return %arg0, %arg2, %c0_i32 : i32, i32, i32
  }
  func.func @transform_3(%arg0: i32, %arg1: i32, %arg2: i32) -> (i32, i32, i32) {
    %c0_i32 = arith.constant 0 : i32
    %c0_i32_0 = arith.constant 0 : i32
    return %arg0, %c0_i32, %arg1 : i32, i32, i32
  }
}

</mosaic_0001>

<llo_original>
// kernel: tpu_custom_call.1
$region0: #{tpu_custom_call.1}
  #allocation0 [shape = 'u32[]', space=smem, size = 0x4, offset = 0x4, fixed_abs, tag = 'smem constant byte address 0x4 - core index']
  #allocation1 [shape = 'u32[144,128]{1,0:T(1,128)}', space=vmem, size = 0x12000, scoped, tag = 'internal scratch']
  #allocation2 [shape = 'f32[128,1]{1,0:T(8,128)}', space=vmem, size = 0x10000, scoped, tag = 'scratch operand']
  #allocation3 [shape = 'f32[128,1]{1,0:T(8,128)}', space=vmem, size = 0x10000, scoped, tag = 'scratch operand']
  #allocation4 [shape = 'f32[128,16]{1,0:T(8,128)}', space=vmem, size = 0x10000, scoped, tag = 'scratch operand']
  %s0 = inlined_call_operand.vmem [shape: bf16[2,256,32], index: 0, kind: input, shape index: {}]
  %s1 = inlined_call_operand.vmem [shape: bf16[2,256,32], index: 1, kind: input, shape index: {}]
  %s2 = inlined_call_operand.vmem [shape: bf16[2,256,16], index: 2, kind: input, shape index: {}]
  %s3 = inlined_call_operand.hbm [shape: f32[2,16,256], index: 3, kind: output, shape index: {}]
  %s4 = sld [smem:[#allocation0]]
  $region53: #{tpu_custom_call.1} parent=0
    _
  %s6 = ssub.s32 1, %s4
  %s7 = scalar_select 0, %s6, %s4
  $region1: #{tpu_custom_call.1} parent=0
    #allocation5 [shape = 'u8[16384]{0}', space=vmem, size = 0x4000, scoped, tag = 'output window, operand 0']
    #allocation6 [shape = 's32[2]{0}', space=sflag, size = 0x8, scoped, tag = 'scoped memory for tpu_custom_call.1']
    %8 = vsyncpa [#allocation6], 0
    %s9 = scalar_lea.sflag [#allocation6], 1
    %10 = vsyncpa %s9, 0
    loop: start=0, step=1, limit=10
    $region2: #{tpu_custom_call.1} parent=1 // loop_pre_header
      _
    $region3: #{tpu_custom_call.1} parent=1 // loop_header
      %s12 = sphi 0, %s16
      %p13 = scmp.ge.s32.totalorder %s12, 10
      %s19 = sphi 0, %s38
      %s20 = sphi 0, %s34
      %s21 = sphi 0, %s30
      %s22 = sphi 0, %s19
      %s23 = sphi 0, %s20
      %s24 = sphi 0, %s21
      %s25 = sphi 0, %s22
      %s26 = sphi 0, %s23
      %s27 = sphi 0, %s24
      %s43 = sphi 0, %s45
      %s46 = sphi 0, %s43
      %s47 = sphi 0, %s46
      %s63 = sphi 0, %s47
      %s71 = sphi 0, %s73
      %s74 = sphi 0, %s71
      %s75 = sphi 0, %s74
      %s91 = sphi 0, %s75
      %s99 = sphi 0, %s101
      %s102 = sphi 0, %s99
      %s103 = sphi 0, %s102
      %s119 = sphi 0, %s103
      %s127 = sphi 0, %s129
      %s130 = sphi 0, %s127
      %s131 = sphi 0, %s130
      %s147 = sphi 0, %s131
    $region4: #{tpu_custom_call.1} parent=1 // loop_header_branch
      %15 = sbr.rel (%p13) target = $region8
    $region5: #{tpu_custom_call.1} parent=1 // loop_body
      %s17 = ssub.s32 %s12, 1
      %s18 = ssub.s32 %s12, 2
      %s28 = sadd.s32 1, %s21
      %p29 = scmp.ge.s32.totalorder %s28, 2
      %s30 = scalar_select %p29, 0, %s28
      %s31 = sadd.s32 1, %s20
      %s32 = scalar_select %p29, %s31, %s20
      %p33 = scmp.ge.s32.totalorder %s32, 2
      %s34 = scalar_select %p33, 0, %s32
      %s35 = sadd.s32 1, %s19
      %s36 = scalar_select %p33, %s35, %s19
      %p37 = scmp.ge.s32.totalorder %s36, 2
      %s38 = scalar_select %p37, 0, %s36
      %s39 = ssub.s32 %s19, %s38
      %s40 = ssub.s32 %s20, %s34
      %s41 = sor.u32 %s39, %s40
      %p42 = scmp.eq.s32.totalorder %s41, 0
      %s44 = sadd.s32 %s43, 1
      %s45 = scalar_select %p42, %s43, %s44
      %p48 = pneg %p42
      %p49 = scmp.eq.s32.totalorder %s12, 7
      %p50 = por %p48, %p49
      %p51 = scmp.ne.s32.totalorder %s43, %s46
      %p52 = scmp.eq.s32.totalorder %s12, 0
      %p53 = por %p51, %p52
      %p54 = scmp.ne.s32.totalorder %s43, %s46
      %p55 = scmp.eq.s32.totalorder %s17, 7
      %p56 = por %p54, %p55
      %p57 = scmp.ne.s32.totalorder %s46, %s47
      %p58 = scmp.eq.s32.totalorder %s17, 0
      %p59 = por %p57, %p58
      %p60 = scmp.ne.s32.totalorder %s46, %s47
      %p61 = scmp.eq.s32.totalorder %s18, 7
      %p62 = por %p60, %p61
      %p64 = scmp.ne.s32.totalorder %s47, %s63
      %p65 = scmp.eq.s32.totalorder %s18, 0
      %p66 = por %p64, %p65
      %s67 = ssub.s32 %s19, %s38
      %s68 = ssub.s32 %s21, %s30
      %s69 = sor.u32 %s67, %s68
      %p70 = scmp.eq.s32.totalorder %s69, 0
      %s72 = sadd.s32 %s71, 1
      %s73 = scalar_select %p70, %s71, %s72
      %p76 = pneg %p70
      %p77 = scmp.eq.s32.totalorder %s12, 7
      %p78 = por %p76, %p77
      %p79 = scmp.ne.s32.totalorder %s71, %s74
      %p80 = scmp.eq.s32.totalorder %s12, 0
      %p81 = por %p79, %p80
      %p82 = scmp.ne.s32.totalorder %s71, %s74
      %p83 = scmp.eq.s32.totalorder %s17, 7
      %p84 = por %p82, %p83
      %p85 = scmp.ne.s32.totalorder %s74, %s75
      %p86 = scmp.eq.s32.totalorder %s17, 0
      %p87 = por %p85, %p86
      %p88 = scmp.ne.s32.totalorder %s74, %s75
      %p89 = scmp.eq.s32.totalorder %s18, 7
      %p90 = por %p88, %p89
      %p92 = scmp.ne.s32.totalorder %s75, %s91
      %p93 = scmp.eq.s32.totalorder %s18, 0
      %p94 = por %p92, %p93
      %s95 = ssub.s32 %s19, %s38
      %s96 = ssub.s32 %s21, %s30
      %s97 = sor.u32 %s95, %s96
      %p98 = scmp.eq.s32.totalorder %s97, 0
      %s100 = sadd.s32 %s99, 1
      %s101 = scalar_select %p98, %s99, %s100
      %p104 = pneg %p98
      %p105 = scmp.eq.s32.totalorder %s12, 7
      %p106 = por %p104, %p105
      %p107 = scmp.ne.s32.totalorder %s99, %s102
      %p108 = scmp.eq.s32.totalorder %s12, 0
      %p109 = por %p107, %p108
      %p110 = scmp.ne.s32.totalorder %s99, %s102
      %p111 = scmp.eq.s32.totalorder %s17, 7
      %p112 = por %p110, %p111
      %p113 = scmp.ne.s32.totalorder %s102, %s103
      %p114 = scmp.eq.s32.totalorder %s17, 0
      %p115 = por %p113, %p114
      %p116 = scmp.ne.s32.totalorder %s102, %s103
      %p117 = scmp.eq.s32.totalorder %s18, 7
      %p118 = por %p116, %p117
      %p120 = scmp.ne.s32.totalorder %s103, %s119
      %p121 = scmp.eq.s32.totalorder %s18, 0
      %p122 = por %p120, %p121
      %s123 = ssub.s32 %s19, %s38
      %s124 = ssub.s32 %s20, %s34
      %s125 = sor.u32 %s123, %s124
      %p126 = scmp.eq.s32.totalorder %s125, 0
      %s128 = sadd.s32 %s127, 1
      %s129 = scalar_select %p126, %s127, %s128
      %p132 = pneg %p126
      %p133 = scmp.eq.s32.totalorder %s12, 7
      %p134 = por %p132, %p133
      %p135 = scmp.ne.s32.totalorder %s127, %s130
      %p136 = scmp.eq.s32.totalorder %s12, 0
      %p137 = por %p135, %p136
      %p138 = scmp.ne.s32.totalorder %s127, %s130
      %p139 = scmp.eq.s32.totalorder %s17, 7
      %p140 = por %p138, %p139
      %p141 = scmp.ne.s32.totalorder %s130, %s131
      %p142 = scmp.eq.s32.totalorder %s17, 0
      %p143 = por %p141, %p142
      %p144 = scmp.ne.s32.totalorder %s130, %s131
      %p145 = scmp.eq.s32.totalorder %s18, 7
      %p146 = por %p144, %p145
      %p148 = scmp.ne.s32.totalorder %s131, %s147
      %p149 = scmp.eq.s32.totalorder %s18, 0
      %p150 = por %p148, %p149
      %p151 = scmp.le.s32.totalorder 1, %s12
      %p152 = scmp.lt.s32.totalorder %s12, 9
      %p153 = pnand %p151, %p152
      %p154 = pneg %p153
      // Predicated region
      $region9: #{tpu_custom_call.1} parent=5 // pred_check
        _
      $region10: #{tpu_custom_call.1} parent=5 // pred_check_branch
        %156 = sbr.rel (%p153) target = $region12
      $region11: #{tpu_custom_call.1} parent=5 // pred_region
        %s157 = ssub.s32 %s12, 1
      $region12: #{tpu_custom_call.1} parent=5 // pred_fallthru
        _
      %p158 = scmp.lt.s32.totalorder %s12, 8
      // Predicated region
      $region13: #{tpu_custom_call.1} parent=5 // pred_check
        %p159 = pneg %p158
      $region14: #{tpu_custom_call.1} parent=5 // pred_check_branch
        %161 = sbr.rel (%p159) target = $region16
      $region15: #{tpu_custom_call.1} parent=5 // pred_region
        // Predicated region
        $region17: #{tpu_custom_call.1} parent=15 // pred_check
          %p162 = pneg %p53
        $region18: #{tpu_custom_call.1} parent=15 // pred_check_branch
          %164 = sbr.rel (%p162) target = $region20
        $region19: #{tpu_custom_call.1} parent=15 // pred_region
          %s165 = smul.u32 16, %s20
          %p166 = scmp.lt.s32.totalorder %s19, 1
          %s167 = scalar_select %p166, %s19, 1
          %p168 = scmp.lt.s32.totalorder %s165, 31
          %s169 = scalar_select %p168, %s165, 31
          %s170 = smul.addr %s167, 32
          %s171 = sadd.s32 %s169, %s170
          %s172 = smul.addr %s171, 4
          %s173 = scalar_lea.vmem %s0, %s172
          %s174 = smul.u32 16, %s20
        $region20: #{tpu_custom_call.1} parent=15 // pred_fallthru
          _
        // Predicated region
        $region21: #{tpu_custom_call.1} parent=15 // pred_check
          %p175 = pneg %p81
        $region22: #{tpu_custom_call.1} parent=15 // pred_check_branch
          %177 = sbr.rel (%p175) target = $region24
        $region23: #{tpu_custom_call.1} parent=15 // pred_region
          %s178 = smul.u32 16, %s21
          %p179 = scmp.lt.s32.totalorder %s19, 1
          %s180 = scalar_select %p179, %s19, 1
          %p181 = scmp.lt.s32.totalorder %s178, 31
          %s182 = scalar_select %p181, %s178, 31
          %s183 = smul.addr %s180, 32
          %s184 = sadd.s32 %s182, %s183
          %s185 = smul.addr %s184, 4
          %s186 = scalar_lea.vmem %s1, %s185
          %s187 = smul.u32 16, %s21
        $region24: #{tpu_custom_call.1} parent=15 // pred_fallthru
          _
        // Predicated region
        $region25: #{tpu_custom_call.1} parent=15 // pred_check
          %p188 = pneg %p109
        $region26: #{tpu_custom_call.1} parent=15 // pred_check_branch
          %190 = sbr.rel (%p188) target = $region28
        $region27: #{tpu_custom_call.1} parent=15 // pred_region
          %s191 = smul.u32 16, %s21
          %p192 = scmp.lt.s32.totalorder %s19, 1
          %s193 = scalar_select %p192, %s19, 1
          %p194 = scmp.lt.s32.totalorder %s191, 31
          %s195 = scalar_select %p194, %s191, 31
          %s196 = smul.addr %s193, 32
          %s197 = sadd.s32 %s195, %s196
          %s198 = smul.addr %s197, 4
          %s199 = scalar_lea.vmem %s2, %s198
          %s200 = smul.u32 16, %s21
        $region28: #{tpu_custom_call.1} parent=15 // pred_fallthru
          _
      $region16: #{tpu_custom_call.1} parent=5 // pred_fallthru
        _
      %p201 = scmp.le.s32.totalorder 1, %s12
      %p202 = scmp.lt.s32.totalorder %s12, 9
      %p203 = pnand %p201, %p202
      %p204 = pneg %p203
      // Predicated region
      $region29: #{tpu_custom_call.1} parent=5 // pred_check
        _
      $region30: #{tpu_custom_call.1} parent=5 // pred_check_branch
        %206 = sbr.rel (%p203) target = $region32
      $region31: #{tpu_custom_call.1} parent=5 // pred_region
        %s207 = ssub.s32 %s12, 1
        %s208 = smul.u32 16, %s23
        %p209 = scmp.lt.s32.totalorder %s22, 1
        %s210 = scalar_select %p209, %s22, 1
        %p211 = scmp.lt.s32.totalorder %s208, 31
        %s212 = scalar_select %p211, %s208, 31
        %s213 = smul.addr %s210, 32
        %s214 = sadd.s32 %s212, %s213
        %s215 = smul.addr %s214, 4
        %s216 = scalar_lea.vmem %s0, %s215
        %p217 = pneg %p59
        %p218 = pneg %p56
        %s219 = smul.u32 16, %s24
        %p220 = scmp.lt.s32.totalorder %s22, 1
        %s221 = scalar_select %p220, %s22, 1
        %p222 = scmp.lt.s32.totalorder %s219, 31
        %s223 = scalar_select %p222, %s219, 31
        %s224 = smul.addr %s221, 32
        %s225 = sadd.s32 %s223, %s224
        %s226 = smul.addr %s225, 4
        %s227 = scalar_lea.vmem %s1, %s226
        %p228 = pneg %p87
        %p229 = pneg %p84
        %s230 = smul.u32 16, %s24
        %p231 = scmp.lt.s32.totalorder %s22, 1
        %s232 = scalar_select %p231, %s22, 1
        %p233 = scmp.lt.s32.totalorder %s230, 31
        %s234 = scalar_select %p233, %s230, 31
        %s235 = smul.addr %s232, 32
        %s236 = sadd.s32 %s234, %s235
        %s237 = smul.addr %s236, 4
        %s238 = scalar_lea.vmem %s2, %s237
        %p239 = pneg %p115
        %p240 = pneg %p112
        %p241 = pneg %p143
        %p242 = pneg %p140
        %s243 = sand.u32 %s130, 1
        %s244 = scalar_lea.sflag [#allocation6], %s243
        %s245 = sand.u32 %s130, 1
        %s246 = smul.addr %s245, 16
        %s247 = scalar_lea.vmem [#allocation5], %s246
        %s248 = smul.u32 16, %s23
        %p249 = scmp.lt.s32.totalorder %s22, 1
        %s250 = scalar_select %p249, %s22, 1
        %p251 = scmp.lt.s32.totalorder %s248, 31
        %s252 = scalar_select %p251, %s248, 31
        %s253 = smul.addr %s250, 32
        %s254 = sadd.s32 %s252, %s253
        %s255 = smul.addr %s254, 4
        %s256 = scalar_lea.vmem %s0, %s255
        %s257 = smul.u32 16, %s23
        %s258 = smul.u32 16, %s24
        %p259 = scmp.lt.s32.totalorder %s22, 1
        %s260 = scalar_select %p259, %s22, 1
        %p261 = scmp.lt.s32.totalorder %s258, 31
        %s262 = scalar_select %p261, %s258, 31
        %s263 = smul.addr %s260, 32
        %s264 = sadd.s32 %s262, %s263
        %s265 = smul.addr %s264, 4
        %s266 = scalar_lea.vmem %s1, %s265
        %s267 = smul.u32 16, %s24
        %s268 = smul.u32 16, %s24
        %p269 = scmp.lt.s32.totalorder %s22, 1
        %s270 = scalar_select %p269, %s22, 1
        %p271 = scmp.lt.s32.totalorder %s268, 31
        %s272 = scalar_select %p271, %s268, 31
        %s273 = smul.addr %s270, 32
        %s274 = sadd.s32 %s272, %s273
        %s275 = smul.addr %s274, 4
        %s276 = scalar_lea.vmem %s2, %s275
        %s277 = smul.u32 16, %s24
        %p279 = scmp.eq.s32.totalorder %s24, 0
        // Predicated region
        $region33: #{tpu_custom_call.1} parent=31 // pred_check
          %p280 = pneg %p279
        $region34: #{tpu_custom_call.1} parent=31 // pred_check_branch
          %282 = sbr.rel (%p280) target = $region36
        $region35: #{tpu_custom_call.1} parent=31 // pred_region
          %vm283 = vcmask 7168
          %284 = vst.msk [vmem:[#allocation2] sm:$0xff] %vm283, -inf
          %285 = vst.msk [vmem:[#allocation2 + $0x8] sm:$0xff] %vm283, -inf
          %286 = vst.msk [vmem:[#allocation2 + $0x10] sm:$0xff] %vm283, -inf
          %287 = vst.msk [vmem:[#allocation2 + $0x18] sm:$0xff] %vm283, -inf
          %288 = vst.msk [vmem:[#allocation2 + $0x20] sm:$0xff] %vm283, -inf
          %289 = vst.msk [vmem:[#allocation2 + $0x28] sm:$0xff] %vm283, -inf
          %290 = vst.msk [vmem:[#allocation2 + $0x30] sm:$0xff] %vm283, -inf
          %291 = vst.msk [vmem:[#allocation2 + $0x38] sm:$0xff] %vm283, -inf
          %292 = vst.msk [vmem:[#allocation2 + $0x40] sm:$0xff] %vm283, -inf
          %293 = vst.msk [vmem:[#allocation2 + $0x48] sm:$0xff] %vm283, -inf
          %294 = vst.msk [vmem:[#allocation2 + $0x50] sm:$0xff] %vm283, -inf
          %295 = vst.msk [vmem:[#allocation2 + $0x58] sm:$0xff] %vm283, -inf
          %296 = vst.msk [vmem:[#allocation2 + $0x60] sm:$0xff] %vm283, -inf
          %297 = vst.msk [vmem:[#allocation2 + $0x68] sm:$0xff] %vm283, -inf
          %298 = vst.msk [vmem:[#allocation2 + $0x70] sm:$0xff] %vm283, -inf
          %299 = vst.msk [vmem:[#allocation2 + $0x78] sm:$0xff] %vm283, -inf
          %300 = vst.msk [vmem:[#allocation3] sm:$0xff] %vm283, 0.0
          %301 = vst.msk [vmem:[#allocation3 + $0x8] sm:$0xff] %vm283, 0.0
          %302 = vst.msk [vmem:[#allocation3 + $0x10] sm:$0xff] %vm283, 0.0
          %303 = vst.msk [vmem:[#allocation3 + $0x18] sm:$0xff] %vm283, 0.0
          %304 = vst.msk [vmem:[#allocation3 + $0x20] sm:$0xff] %vm283, 0.0
          %305 = vst.msk [vmem:[#allocation3 + $0x28] sm:$0xff] %vm283, 0.0
          %306 = vst.msk [vmem:[#allocation3 + $0x30] sm:$0xff] %vm283, 0.0
          %307 = vst.msk [vmem:[#allocation3 + $0x38] sm:$0xff] %vm283, 0.0
          %308 = vst.msk [vmem:[#allocation3 + $0x40] sm:$0xff] %vm283, 0.0
          %309 = vst.msk [vmem:[#allocation3 + $0x48] sm:$0xff] %vm283, 0.0
          %310 = vst.msk [vmem:[#allocation3 + $0x50] sm:$0xff] %vm283, 0.0
          %311 = vst.msk [vmem:[#allocation3 + $0x58] sm:$0xff] %vm283, 0.0
          %312 = vst.msk [vmem:[#allocation3 + $0x60] sm:$0xff] %vm283, 0.0
          %313 = vst.msk [vmem:[#allocation3 + $0x68] sm:$0xff] %vm283, 0.0
          %314 = vst.msk [vmem:[#allocation3 + $0x70] sm:$0xff] %vm283, 0.0
          %315 = vst.msk [vmem:[#allocation3 + $0x78] sm:$0xff] %vm283, 0.0
          %vm316 = vcmask 130048
          %317 = vst.msk [vmem:[#allocation4] sm:$0xff] %vm316, 0.0
          %318 = vst.msk [vmem:[#allocation4 + $0x8] sm:$0xff] %vm316, 0.0
          %319 = vst.msk [vmem:[#allocation4 + $0x10] sm:$0xff] %vm316, 0.0
          %320 = vst.msk [vmem:[#allocation4 + $0x18] sm:$0xff] %vm316, 0.0
          %321 = vst.msk [vmem:[#allocation4 + $0x20] sm:$0xff] %vm316, 0.0
          %322 = vst.msk [vmem:[#allocation4 + $0x28] sm:$0xff] %vm316, 0.0
          %323 = vst.msk [vmem:[#allocation4 + $0x30] sm:$0xff] %vm316, 0.0
          %324 = vst.msk [vmem:[#allocation4 + $0x38] sm:$0xff] %vm316, 0.0
          %325 = vst.msk [vmem:[#allocation4 + $0x40] sm:$0xff] %vm316, 0.0
          %326 = vst.msk [vmem:[#allocation4 + $0x48] sm:$0xff] %vm316, 0.0
          %327 = vst.msk [vmem:[#allocation4 + $0x50] sm:$0xff] %vm316, 0.0
          %328 = vst.msk [vmem:[#allocation4 + $0x58] sm:$0xff] %vm316, 0.0
          %329 = vst.msk [vmem:[#allocation4 + $0x60] sm:$0xff] %vm316, 0.0
          %330 = vst.msk [vmem:[#allocation4 + $0x68] sm:$0xff] %vm316, 0.0
          %331 = vst.msk [vmem:[#allocation4 + $0x70] sm:$0xff] %vm316, 0.0
          %332 = vst.msk [vmem:[#allocation4 + $0x78] sm:$0xff] %vm316, 0.0
        $region36: #{tpu_custom_call.1} parent=31 // pred_fallthru
          _
        %v333 = vld [vmem:[%s256] sm:$0xf]
        %v334 = vld [vmem:[%s256 + $0x4] sm:$0xf]
        %v335 = vld [vmem:[%s256 + $0x8] sm:$0xf]
        %v336 = vld [vmem:[%s256 + $0xc] sm:$0xf]
        %v337 = vld [vmem:[%s256 + $0x10] sm:$0xf]
        %v338 = vld [vmem:[%s256 + $0x14] sm:$0xf]
        %v339 = vld [vmem:[%s256 + $0x18] sm:$0xf]
        %v340 = vld [vmem:[%s256 + $0x1c] sm:$0xf]
        %v341 = vld [vmem:[%s256 + $0x20] sm:$0xf]
        %v342 = vld [vmem:[%s256 + $0x24] sm:$0xf]
        %v343 = vld [vmem:[%s256 + $0x28] sm:$0xf]
        %v344 = vld [vmem:[%s256 + $0x2c] sm:$0xf]
        %v345 = vld [vmem:[%s256 + $0x30] sm:$0xf]
        %v346 = vld [vmem:[%s256 + $0x34] sm:$0xf]
        %v347 = vld [vmem:[%s256 + $0x38] sm:$0xf]
        %v348 = vld [vmem:[%s256 + $0x3c] sm:$0xf]
        %v349 = vld [vmem:[%s266] sm:$0xf]
        %v350 = vld [vmem:[%s266 + $0x4] sm:$0xf]
        %v351 = vld [vmem:[%s266 + $0x8] sm:$0xf]
        %v352 = vld [vmem:[%s266 + $0xc] sm:$0xf]
        %v353 = vld [vmem:[%s266 + $0x10] sm:$0xf]
        %v354 = vld [vmem:[%s266 + $0x14] sm:$0xf]
        %v355 = vld [vmem:[%s266 + $0x18] sm:$0xf]
        %v356 = vld [vmem:[%s266 + $0x1c] sm:$0xf]
        %v357 = vld [vmem:[%s266 + $0x20] sm:$0xf]
        %v358 = vld [vmem:[%s266 + $0x24] sm:$0xf]
        %v359 = vld [vmem:[%s266 + $0x28] sm:$0xf]
        %v360 = vld [vmem:[%s266 + $0x2c] sm:$0xf]
        %v361 = vld [vmem:[%s266 + $0x30] sm:$0xf]
        %v362 = vld [vmem:[%s266 + $0x34] sm:$0xf]
        %v363 = vld [vmem:[%s266 + $0x38] sm:$0xf]
        %v364 = vld [vmem:[%s266 + $0x3c] sm:$0xf]
        %v365 = vld [vmem:[%s276] sm:$0xf]
        %v366 = vld [vmem:[%s276 + $0x4] sm:$0xf]
        %v367 = vld [vmem:[%s276 + $0x8] sm:$0xf]
        %v368 = vld [vmem:[%s276 + $0xc] sm:$0xf]
        %v369 = vld [vmem:[%s276 + $0x10] sm:$0xf]
        %v370 = vld [vmem:[%s276 + $0x14] sm:$0xf]
        %v371 = vld [vmem:[%s276 + $0x18] sm:$0xf]
        %v372 = vld [vmem:[%s276 + $0x1c] sm:$0xf]
        %v373 = vld [vmem:[%s276 + $0x20] sm:$0xf]
        %v374 = vld [vmem:[%s276 + $0x24] sm:$0xf]
        %v375 = vld [vmem:[%s276 + $0x28] sm:$0xf]
        %v376 = vld [vmem:[%s276 + $0x2c] sm:$0xf]
        %v377 = vld [vmem:[%s276 + $0x30] sm:$0xf]
        %v378 = vld [vmem:[%s276 + $0x34] sm:$0xf]
        %v379 = vld [vmem:[%s276 + $0x38] sm:$0xf]
        %v380 = vld [vmem:[%s276 + $0x3c] sm:$0xf]
        %v397 = vunpack.c.l.b16 %v333
        %v398 = vunpack.c.l.b16 %v334
        %v399 = vunpack.c.l.b16 %v335
        %v400 = vunpack.c.l.b16 %v336
        %v401 = vunpack.c.l.b16 %v337
        %v402 = vunpack.c.l.b16 %v338
        %v403 = vunpack.c.l.b16 %v339
        %v404 = vunpack.c.l.b16 %v340
        %v405 = vunpack.c.l.b16 %v341
        %v406 = vunpack.c.l.b16 %v342
        %v407 = vunpack.c.l.b16 %v343
        %v408 = vunpack.c.l.b16 %v344
        %v409 = vunpack.c.l.b16 %v345
        %v410 = vunpack.c.l.b16 %v346
        %v411 = vunpack.c.l.b16 %v347
        %v412 = vunpack.c.l.b16 %v348
        %v413 = vpack.c.b16 %v398, %v397
        %v414 = vpack.c.b16 %v400, %v399
        %v415 = vpack.c.b16 %v402, %v401
        %v416 = vpack.c.b16 %v404, %v403
        %v417 = vpack.c.b16 %v406, %v405
        %v418 = vpack.c.b16 %v408, %v407
        %v419 = vpack.c.b16 %v410, %v409
        %v420 = vpack.c.b16 %v412, %v411
        %v437 = vunpack.c.l.b16 %v349
        %v438 = vunpack.c.l.b16 %v350
        %v439 = vunpack.c.l.b16 %v351
        %v440 = vunpack.c.l.b16 %v352
        %v441 = vunpack.c.l.b16 %v353
        %v442 = vunpack.c.l.b16 %v354
        %v443 = vunpack.c.l.b16 %v355
        %v444 = vunpack.c.l.b16 %v356
        %v445 = vunpack.c.l.b16 %v357
        %v446 = vunpack.c.l.b16 %v358
        %v447 = vunpack.c.l.b16 %v359
        %v448 = vunpack.c.l.b16 %v360
        %v449 = vunpack.c.l.b16 %v361
        %v450 = vunpack.c.l.b16 %v362
        %v451 = vunpack.c.l.b16 %v363
        %v452 = vunpack.c.l.b16 %v364
        %v453 = vpack.c.b16 %v438, %v437
        %v454 = vpack.c.b16 %v440, %v439
        %v455 = vpack.c.b16 %v442, %v441
        %v456 = vpack.c.b16 %v444, %v443
        %v457 = vpack.c.b16 %v446, %v445
        %v458 = vpack.c.b16 %v448, %v447
        %v459 = vpack.c.b16 %v450, %v449
        %v460 = vpack.c.b16 %v452, %v451
        %vm461 = vcmask 261120
        %v463 = vsel %vm461, %v413, 0
        %v466 = vsel %vm461, %v414, 0
        %v469 = vsel %vm461, %v415, 0
        %v472 = vsel %vm461, %v416, 0
        %v475 = vsel %vm461, %v417, 0
        %v478 = vsel %vm461, %v418, 0
        %v481 = vsel %vm461, %v419, 0
        %v484 = vsel %vm461, %v420, 0
        %v487 = vsel %vm461, %v453, 0
        %v490 = vsel %vm461, %v454, 0
        %v493 = vsel %vm461, %v455, 0
        %v496 = vsel %vm461, %v456, 0
        %v499 = vsel %vm461, %v457, 0
        %v502 = vsel %vm461, %v458, 0
        %v505 = vsel %vm461, %v459, 0
        %v508 = vsel %vm461, %v460, 0
        %510 = vmatprep.subr.bf16.mxu0 0
        %511 = vmatpush1.bf16.xpose.msra.mxu0 %v508
        %512 = vmatprep.subr.bf16.mxu0 0
        %513 = vmatpush1.bf16.xpose.msra.mxu0 %v505
        %514 = vmatprep.subr.bf16.mxu0 0
        %515 = vmatpush1.bf16.xpose.msra.mxu0 %v502
        %516 = vmatprep.subr.bf16.mxu0 0
        %517 = vmatpush1.bf16.xpose.msra.mxu0 %v499
        %518 = vmatprep.subr.bf16.mxu0 0
        %519 = vmatpush1.bf16.xpose.msra.mxu0 %v496
        %520 = vmatprep.subr.bf16.mxu0 0
        %521 = vmatpush1.bf16.xpose.msra.mxu0 %v493
        %522 = vmatprep.subr.bf16.mxu0 0
        %523 = vmatpush1.bf16.xpose.msra.mxu0 %v490
        %524 = vmatprep.subr.bf16.mxu0 0
        %525 = vmatpush1.bf16.xpose.msra.mxu0 %v487
        %526 = vmatprep.subr.bf16.mxu0 0
        %527 = vmatpush2.bf16.xpose.msra.mxu0 0
        %528 = vmatprep.subr.bf16.mxu0 0
        %529 = vmatpush2.bf16.xpose.msra.mxu0 0
        %530 = vmatprep.subr.bf16.mxu0 0
        %531 = vmatpush2.bf16.xpose.msra.mxu0 0
        %532 = vmatprep.subr.bf16.mxu0 0
        %533 = vmatpush2.bf16.xpose.msra.mxu0 0
        %534 = vmatprep.subr.bf16.mxu0 0
        %535 = vmatpush2.bf16.xpose.msra.mxu0 0
        %536 = vmatprep.subr.bf16.mxu0 0
        %537 = vmatpush2.bf16.xpose.msra.mxu0 0
        %538 = vmatprep.subr.bf16.mxu0 0
        %539 = vmatpush2.bf16.xpose.msra.mxu0 0
        %540 = vmatprep.subr.bf16.mxu0 0
        %541 = vmatpush2.bf16.xpose.msra.mxu0 0
        %542 = vmatprep.mubr.bf16.mxu0 0
        %543 = vmatmul.mubr.bf16.gmra.mxu0 %v463
        %v544 = vpop.f32.mrf.mxu0
        %v545 = vadd.f32 0.0, %v544
        %v546 = vpop.f32.mrf.mxu0
        %v547 = vpop.f32.mrf.mxu0
        %v548 = vadd.f32 0.0, %v547
        %v549 = vpop.f32.mrf.mxu0
        %550 = vmatprep.mubr.bf16.mxu0 0
        %551 = vmatmul.mubr.bf16.gmra.mxu0 %v466
        %v552 = vpop.f32.mrf.mxu0
        %v553 = vadd.f32 0.0, %v552
        %v554 = vpop.f32.mrf.mxu0
        %v555 = vpop.f32.mrf.mxu0
        %v556 = vadd.f32 0.0, %v555
        %v557 = vpop.f32.mrf.mxu0
        %558 = vmatprep.mubr.bf16.mxu0 0
        %559 = vmatmul.mubr.bf16.gmra.mxu0 %v469
        %v560 = vpop.f32.mrf.mxu0
        %v561 = vadd.f32 0.0, %v560
        %v562 = vpop.f32.mrf.mxu0
        %v563 = vpop.f32.mrf.mxu0
        %v564 = vadd.f32 0.0, %v563
        %v565 = vpop.f32.mrf.mxu0
        %566 = vmatprep.mubr.bf16.mxu0 0
        %567 = vmatmul.mubr.bf16.gmra.mxu0 %v472
        %v568 = vpop.f32.mrf.mxu0
        %v569 = vadd.f32 0.0, %v568
        %v570 = vpop.f32.mrf.mxu0
        %v571 = vpop.f32.mrf.mxu0
        %v572 = vadd.f32 0.0, %v571
        %v573 = vpop.f32.mrf.mxu0
        %574 = vmatprep.mubr.bf16.mxu0 0
        %575 = vmatmul.mubr.bf16.gmra.mxu0 %v475
        %v576 = vpop.f32.mrf.mxu0
        %v577 = vadd.f32 0.0, %v576
        %v578 = vpop.f32.mrf.mxu0
        %v579 = vpop.f32.mrf.mxu0
        %v580 = vadd.f32 0.0, %v579
        %v581 = vpop.f32.mrf.mxu0
        %582 = vmatprep.mubr.bf16.mxu0 0
        %583 = vmatmul.mubr.bf16.gmra.mxu0 %v478
        %v584 = vpop.f32.mrf.mxu0
        %v585 = vadd.f32 0.0, %v584
        %v586 = vpop.f32.mrf.mxu0
        %v587 = vpop.f32.mrf.mxu0
        %v588 = vadd.f32 0.0, %v587
        %v589 = vpop.f32.mrf.mxu0
        %590 = vmatprep.mubr.bf16.mxu0 0
        %591 = vmatmul.mubr.bf16.gmra.mxu0 %v481
        %v592 = vpop.f32.mrf.mxu0
        %v593 = vadd.f32 0.0, %v592
        %v594 = vpop.f32.mrf.mxu0
        %v595 = vpop.f32.mrf.mxu0
        %v596 = vadd.f32 0.0, %v595
        %v597 = vpop.f32.mrf.mxu0
        %598 = vmatprep.mubr.bf16.mxu0 0
        %599 = vmatmul.mubr.bf16.gmra.mxu0 %v484
        %v600 = vpop.f32.mrf.mxu0
        %v601 = vadd.f32 0.0, %v600
        %v602 = vpop.f32.mrf.mxu0
        %v603 = vpop.f32.mrf.mxu0
        %v604 = vadd.f32 0.0, %v603
        %v605 = vpop.f32.mrf.mxu0
        %606 = vdwg.mxu0
        %v607 = vmul.f32 %v545, 0.17677669
        %v608 = vmul.f32 %v548, 0.17677669
        %v609 = vmul.f32 %v553, 0.17677669
        %v610 = vmul.f32 %v556, 0.17677669
        %v611 = vmul.f32 %v561, 0.17677669
        %v612 = vmul.f32 %v564, 0.17677669
        %v613 = vmul.f32 %v569, 0.17677669
        %v614 = vmul.f32 %v572, 0.17677669
        %v615 = vmul.f32 %v577, 0.17677669
        %v616 = vmul.f32 %v580, 0.17677669
        %v617 = vmul.f32 %v585, 0.17677669
        %v618 = vmul.f32 %v588, 0.17677669
        %v619 = vmul.f32 %v593, 0.17677669
        %v620 = vmul.f32 %v596, 0.17677669
        %v621 = vmul.f32 %v601, 0.17677669
        %v622 = vmul.f32 %v604, 0.17677669
        %v623 = vld [vmem:[#allocation2] sm:$0xff]
        %v624 = vld [vmem:[#allocation2 + $0x8] sm:$0xff]
        %v625 = vld [vmem:[#allocation2 + $0x10] sm:$0xff]
        %v626 = vld [vmem:[#allocation2 + $0x18] sm:$0xff]
        %v627 = vld [vmem:[#allocation2 + $0x20] sm:$0xff]
        %v628 = vld [vmem:[#allocation2 + $0x28] sm:$0xff]
        %v629 = vld [vmem:[#allocation2 + $0x30] sm:$0xff]
        %v630 = vld [vmem:[#allocation2 + $0x38] sm:$0xff]
        %v631 = vld [vmem:[#allocation2 + $0x40] sm:$0xff]
        %v632 = vld [vmem:[#allocation2 + $0x48] sm:$0xff]
        %v633 = vld [vmem:[#allocation2 + $0x50] sm:$0xff]
        %v634 = vld [vmem:[#allocation2 + $0x58] sm:$0xff]
        %v635 = vld [vmem:[#allocation2 + $0x60] sm:$0xff]
        %v636 = vld [vmem:[#allocation2 + $0x68] sm:$0xff]
        %v637 = vld [vmem:[#allocation2 + $0x70] sm:$0xff]
        %v638 = vld [vmem:[#allocation2 + $0x78] sm:$0xff]
        %639 = vmax.xlane.f32.xlu0 %v607
        %v640 = vpop.xlane.xlu0 %639
        %641 = vmax.xlane.f32.xlu0 %v608
        %v642 = vpop.xlane.xlu0 %641
        %643 = vmax.xlane.f32.xlu0 %v609
        %v644 = vpop.xlane.xlu0 %643
        %645 = vmax.xlane.f32.xlu0 %v610
        %v646 = vpop.xlane.xlu0 %645
        %647 = vmax.xlane.f32.xlu0 %v611
        %v648 = vpop.xlane.xlu0 %647
        %649 = vmax.xlane.f32.xlu0 %v612
        %v650 = vpop.xlane.xlu0 %649
        %651 = vmax.xlane.f32.xlu0 %v613
        %v652 = vpop.xlane.xlu0 %651
        %653 = vmax.xlane.f32.xlu0 %v614
        %v654 = vpop.xlane.xlu0 %653
        %655 = vmax.xlane.f32.xlu0 %v615
        %v656 = vpop.xlane.xlu0 %655
        %657 = vmax.xlane.f32.xlu0 %v616
        %v658 = vpop.xlane.xlu0 %657
        %659 = vmax.xlane.f32.xlu0 %v617
        %v660 = vpop.xlane.xlu0 %659
        %661 = vmax.xlane.f32.xlu0 %v618
        %v662 = vpop.xlane.xlu0 %661
        %663 = vmax.xlane.f32.xlu0 %v619
        %v664 = vpop.xlane.xlu0 %663
        %665 = vmax.xlane.f32.xlu0 %v620
        %v666 = vpop.xlane.xlu0 %665
        %667 = vmax.xlane.f32.xlu0 %v621
        %v668 = vpop.xlane.xlu0 %667
        %669 = vmax.xlane.f32.xlu0 %v622
        %v670 = vpop.xlane.xlu0 %669
        %v671 = vmax.f32 %v623, %v640
        %v672 = vmax.f32 %v624, %v642
        %v673 = vmax.f32 %v625, %v644
        %v674 = vmax.f32 %v626, %v646
        %v675 = vmax.f32 %v627, %v648
        %v676 = vmax.f32 %v628, %v650
        %v677 = vmax.f32 %v629, %v652
        %v678 = vmax.f32 %v630, %v654
        %v679 = vmax.f32 %v631, %v656
        %v680 = vmax.f32 %v632, %v658
        %v681 = vmax.f32 %v633, %v660
        %v682 = vmax.f32 %v634, %v662
        %v683 = vmax.f32 %v635, %v664
        %v684 = vmax.f32 %v636, %v666
        %v685 = vmax.f32 %v637, %v668
        %v686 = vmax.f32 %v638, %v670
        %v687 = vsub.f32 %v623, %v671
        %v688 = vsub.f32 %v624, %v672
        %v689 = vsub.f32 %v625, %v673
        %v690 = vsub.f32 %v626, %v674
        %v691 = vsub.f32 %v627, %v675
        %v692 = vsub.f32 %v628, %v676
        %v693 = vsub.f32 %v629, %v677
        %v694 = vsub.f32 %v630, %v678
        %v695 = vsub.f32 %v631, %v679
        %v696 = vsub.f32 %v632, %v680
        %v697 = vsub.f32 %v633, %v681
        %v698 = vsub.f32 %v634, %v682
        %v699 = vsub.f32 %v635, %v683
        %v700 = vsub.f32 %v636, %v684
        %v701 = vsub.f32 %v637, %v685
        %v702 = vsub.f32 %v638, %v686
        %v703 = vmul.f32 %v687, 1.442695
        %v704 = vpow.pop %v703
        %v705 = vmul.f32 %v688, 1.442695
        %v706 = vpow.pop %v705
        %v707 = vmul.f32 %v689, 1.442695
        %v708 = vpow.pop %v707
        %v709 = vmul.f32 %v690, 1.442695
        %v710 = vpow.pop %v709
        %v711 = vmul.f32 %v691, 1.442695
        %v712 = vpow.pop %v711
        %v713 = vmul.f32 %v692, 1.442695
        %v714 = vpow.pop %v713
        %v715 = vmul.f32 %v693, 1.442695
        %v716 = vpow.pop %v715
        %v717 = vmul.f32 %v694, 1.442695
        %v718 = vpow.pop %v717
        %v719 = vmul.f32 %v695, 1.442695
        %v720 = vpow.pop %v719
        %v721 = vmul.f32 %v696, 1.442695
        %v722 = vpow.pop %v721
        %v723 = vmul.f32 %v697, 1.442695
        %v724 = vpow.pop %v723
        %v725 = vmul.f32 %v698, 1.442695
        %v726 = vpow.pop %v725
        %v727 = vmul.f32 %v699, 1.442695
        %v728 = vpow.pop %v727
        %v729 = vmul.f32 %v700, 1.442695
        %v730 = vpow.pop %v729
        %v731 = vmul.f32 %v701, 1.442695
        %v732 = vpow.pop %v731
        %v733 = vmul.f32 %v702, 1.442695
        %v734 = vpow.pop %v733
        %736 = vset.pattern.permute.xlu0 0
        %737 = vperm.xlu0 %736, %v671
        %v738 = vpop.permute.xlu0 %737
        %741 = vset.pattern.permute.xlu0 0
        %742 = vperm.xlu0 %741, %v672
        %v743 = vpop.permute.xlu0 %742
        %746 = vset.pattern.permute.xlu0 0
        %747 = vperm.xlu0 %746, %v673
        %v748 = vpop.permute.xlu0 %747
        %751 = vset.pattern.permute.xlu0 0
        %752 = vperm.xlu0 %751, %v674
        %v753 = vpop.permute.xlu0 %752
        %756 = vset.pattern.permute.xlu0 0
        %757 = vperm.xlu0 %756, %v675
        %v758 = vpop.permute.xlu0 %757
        %761 = vset.pattern.permute.xlu0 0
        %762 = vperm.xlu0 %761, %v676
        %v763 = vpop.permute.xlu0 %762
        %766 = vset.pattern.permute.xlu0 0
        %767 = vperm.xlu0 %766, %v677
        %v768 = vpop.permute.xlu0 %767
        %771 = vset.pattern.permute.xlu0 0
        %772 = vperm.xlu0 %771, %v678
        %v773 = vpop.permute.xlu0 %772
        %776 = vset.pattern.permute.xlu0 0
        %777 = vperm.xlu0 %776, %v679
        %v778 = vpop.permute.xlu0 %777
        %781 = vset.pattern.permute.xlu0 0
        %782 = vperm.xlu0 %781, %v680
        %v783 = vpop.permute.xlu0 %782
        %786 = vset.pattern.permute.xlu0 0
        %787 = vperm.xlu0 %786, %v681
        %v788 = vpop.permute.xlu0 %787
        %791 = vset.pattern.permute.xlu0 0
        %792 = vperm.xlu0 %791, %v682
        %v793 = vpop.permute.xlu0 %792
        %796 = vset.pattern.permute.xlu0 0
        %797 = vperm.xlu0 %796, %v683
        %v798 = vpop.permute.xlu0 %797
        %801 = vset.pattern.permute.xlu0 0
        %802 = vperm.xlu0 %801, %v684
        %v803 = vpop.permute.xlu0 %802
        %806 = vset.pattern.permute.xlu0 0
        %807 = vperm.xlu0 %806, %v685
        %v808 = vpop.permute.xlu0 %807
        %811 = vset.pattern.permute.xlu0 0
        %812 = vperm.xlu0 %811, %v686
        %v813 = vpop.permute.xlu0 %812
        %v815 = vsub.f32 %v607, %v738
        %v816 = vsub.f32 %v608, %v743
        %v817 = vsub.f32 %v609, %v748
        %v818 = vsub.f32 %v610, %v753
        %v819 = vsub.f32 %v611, %v758
        %v820 = vsub.f32 %v612, %v763
        %v821 = vsub.f32 %v613, %v768
        %v822 = vsub.f32 %v614, %v773
        %v823 = vsub.f32 %v615, %v778
        %v824 = vsub.f32 %v616, %v783
        %v825 = vsub.f32 %v617, %v788
        %v826 = vsub.f32 %v618, %v793
        %v827 = vsub.f32 %v619, %v798
        %v828 = vsub.f32 %v620, %v803
        %v829 = vsub.f32 %v621, %v808
        %v830 = vsub.f32 %v622, %v813
        %v831 = vmul.f32 %v815, 1.442695
        %v832 = vpow.pop %v831
        %v833 = vmul.f32 %v816, 1.442695
        %v834 = vpow.pop %v833
        %v835 = vmul.f32 %v817, 1.442695
        %v836 = vpow.pop %v835
        %v837 = vmul.f32 %v818, 1.442695
        %v838 = vpow.pop %v837
        %v839 = vmul.f32 %v819, 1.442695
        %v840 = vpow.pop %v839
        %v841 = vmul.f32 %v820, 1.442695
        %v842 = vpow.pop %v841
        %v843 = vmul.f32 %v821, 1.442695
        %v844 = vpow.pop %v843
        %v845 = vmul.f32 %v822, 1.442695
        %v846 = vpow.pop %v845
        %v847 = vmul.f32 %v823, 1.442695
        %v848 = vpow.pop %v847
        %v849 = vmul.f32 %v824, 1.442695
        %v850 = vpow.pop %v849
        %v851 = vmul.f32 %v825, 1.442695
        %v852 = vpow.pop %v851
        %v853 = vmul.f32 %v826, 1.442695
        %v854 = vpow.pop %v853
        %v855 = vmul.f32 %v827, 1.442695
        %v856 = vpow.pop %v855
        %v857 = vmul.f32 %v828, 1.442695
        %v858 = vpow.pop %v857
        %v859 = vmul.f32 %v829, 1.442695
        %v860 = vpow.pop %v859
        %v861 = vmul.f32 %v830, 1.442695
        %v862 = vpow.pop %v861
        %v863 = vld [vmem:[#allocation3] sm:$0xff]
        %v864 = vld [vmem:[#allocation3 + $0x8] sm:$0xff]
        %v865 = vld [vmem:[#allocation3 + $0x10] sm:$0xff]
        %v866 = vld [vmem:[#allocation3 + $0x18] sm:$0xff]
        %v867 = vld [vmem:[#allocation3 + $0x20] sm:$0xff]
        %v868 = vld [vmem:[#allocation3 + $0x28] sm:$0xff]
        %v869 = vld [vmem:[#allocation3 + $0x30] sm:$0xff]
        %v870 = vld [vmem:[#allocation3 + $0x38] sm:$0xff]
        %v871 = vld [vmem:[#allocation3 + $0x40] sm:$0xff]
        %v872 = vld [vmem:[#allocation3 + $0x48] sm:$0xff]
        %v873 = vld [vmem:[#allocation3 + $0x50] sm:$0xff]
        %v874 = vld [vmem:[#allocation3 + $0x58] sm:$0xff]
        %v875 = vld [vmem:[#allocation3 + $0x60] sm:$0xff]
        %v876 = vld [vmem:[#allocation3 + $0x68] sm:$0xff]
        %v877 = vld [vmem:[#allocation3 + $0x70] sm:$0xff]
        %v878 = vld [vmem:[#allocation3 + $0x78] sm:$0xff]
        %v879 = vmul.f32 %v704, %v863
        %v880 = vmul.f32 %v706, %v864
        %v881 = vmul.f32 %v708, %v865
        %v882 = vmul.f32 %v710, %v866
        %v883 = vmul.f32 %v712, %v867
        %v884 = vmul.f32 %v714, %v868
        %v885 = vmul.f32 %v716, %v869
        %v886 = vmul.f32 %v718, %v870
        %v887 = vmul.f32 %v720, %v871
        %v888 = vmul.f32 %v722, %v872
        %v889 = vmul.f32 %v724, %v873
        %v890 = vmul.f32 %v726, %v874
        %v891 = vmul.f32 %v728, %v875
        %v892 = vmul.f32 %v730, %v876
        %v893 = vmul.f32 %v732, %v877
        %v894 = vmul.f32 %v734, %v878
        %895 = vadd.xlane.f32.xlu0 %v832
        %v896 = vpop.xlane.xlu0 %895
        %897 = vadd.xlane.f32.xlu0 %v834
        %v898 = vpop.xlane.xlu0 %897
        %899 = vadd.xlane.f32.xlu0 %v836
        %v900 = vpop.xlane.xlu0 %899
        %901 = vadd.xlane.f32.xlu0 %v838
        %v902 = vpop.xlane.xlu0 %901
        %903 = vadd.xlane.f32.xlu0 %v840
        %v904 = vpop.xlane.xlu0 %903
        %905 = vadd.xlane.f32.xlu0 %v842
        %v906 = vpop.xlane.xlu0 %905
        %907 = vadd.xlane.f32.xlu0 %v844
        %v908 = vpop.xlane.xlu0 %907
        %909 = vadd.xlane.f32.xlu0 %v846
        %v910 = vpop.xlane.xlu0 %909
        %911 = vadd.xlane.f32.xlu0 %v848
        %v912 = vpop.xlane.xlu0 %911
        %913 = vadd.xlane.f32.xlu0 %v850
        %v914 = vpop.xlane.xlu0 %913
        %915 = vadd.xlane.f32.xlu0 %v852
        %v916 = vpop.xlane.xlu0 %915
        %917 = vadd.xlane.f32.xlu0 %v854
        %v918 = vpop.xlane.xlu0 %917
        %919 = vadd.xlane.f32.xlu0 %v856
        %v920 = vpop.xlane.xlu0 %919
        %921 = vadd.xlane.f32.xlu0 %v858
        %v922 = vpop.xlane.xlu0 %921
        %923 = vadd.xlane.f32.xlu0 %v860
        %v924 = vpop.xlane.xlu0 %923
        %925 = vadd.xlane.f32.xlu0 %v862
        %v926 = vpop.xlane.xlu0 %925
        %v927 = vadd.f32 %v879, %v896
        %v928 = vadd.f32 %v880, %v898
        %v929 = vadd.f32 %v881, %v900
        %v930 = vadd.f32 %v882, %v902
        %v931 = vadd.f32 %v883, %v904
        %v932 = vadd.f32 %v884, %v906
        %v933 = vadd.f32 %v885, %v908
        %v934 = vadd.f32 %v886, %v910
        %v935 = vadd.f32 %v887, %v912
        %v936 = vadd.f32 %v888, %v914
        %v937 = vadd.f32 %v889, %v916
        %v938 = vadd.f32 %v890, %v918
        %v939 = vadd.f32 %v891, %v920
        %v940 = vadd.f32 %v892, %v922
        %v941 = vadd.f32 %v893, %v924
        %v942 = vadd.f32 %v894, %v926
        %vm943 = vcmask 7168
        %944 = vst.msk [vmem:[#allocation3] sm:$0xff] %vm943, %v927
        %945 = vst.msk [vmem:[#allocation3 + $0x8] sm:$0xff] %vm943, %v928
        %946 = vst.msk [vmem:[#allocation3 + $0x10] sm:$0xff] %vm943, %v929
        %947 = vst.msk [vmem:[#allocation3 + $0x18] sm:$0xff] %vm943, %v930
        %948 = vst.msk [vmem:[#allocation3 + $0x20] sm:$0xff] %vm943, %v931
        %949 = vst.msk [vmem:[#allocation3 + $0x28] sm:$0xff] %vm943, %v932
        %950 = vst.msk [vmem:[#allocation3 + $0x30] sm:$0xff] %vm943, %v933
        %951 = vst.msk [vmem:[#allocation3 + $0x38] sm:$0xff] %vm943, %v934
        %952 = vst.msk [vmem:[#allocation3 + $0x40] sm:$0xff] %vm943, %v935
        %953 = vst.msk [vmem:[#allocation3 + $0x48] sm:$0xff] %vm943, %v936
        %954 = vst.msk [vmem:[#allocation3 + $0x50] sm:$0xff] %vm943, %v937
        %955 = vst.msk [vmem:[#allocation3 + $0x58] sm:$0xff] %vm943, %v938
        %956 = vst.msk [vmem:[#allocation3 + $0x60] sm:$0xff] %vm943, %v939
        %957 = vst.msk [vmem:[#allocation3 + $0x68] sm:$0xff] %vm943, %v940
        %958 = vst.msk [vmem:[#allocation3 + $0x70] sm:$0xff] %vm943, %v941
        %959 = vst.msk [vmem:[#allocation3 + $0x78] sm:$0xff] %vm943, %v942
        %v960 = vld [vmem:[#allocation4] sm:$0xff]
        %v961 = vld [vmem:[#allocation4 + $0x8] sm:$0xff]
        %v962 = vld [vmem:[#allocation4 + $0x10] sm:$0xff]
        %v963 = vld [vmem:[#allocation4 + $0x18] sm:$0xff]
        %v964 = vld [vmem:[#allocation4 + $0x20] sm:$0xff]
        %v965 = vld [vmem:[#allocation4 + $0x28] sm:$0xff]
        %v966 = vld [vmem:[#allocation4 + $0x30] sm:$0xff]
        %v967 = vld [vmem:[#allocation4 + $0x38] sm:$0xff]
        %v968 = vld [vmem:[#allocation4 + $0x40] sm:$0xff]
        %v969 = vld [vmem:[#allocation4 + $0x48] sm:$0xff]
        %v970 = vld [vmem:[#allocation4 + $0x50] sm:$0xff]
        %v971 = vld [vmem:[#allocation4 + $0x58] sm:$0xff]
        %v972 = vld [vmem:[#allocation4 + $0x60] sm:$0xff]
        %v973 = vld [vmem:[#allocation4 + $0x68] sm:$0xff]
        %v974 = vld [vmem:[#allocation4 + $0x70] sm:$0xff]
        %v975 = vld [vmem:[#allocation4 + $0x78] sm:$0xff]
        %977 = vset.pattern.permute.xlu0 0
        %978 = vperm.xlu0 %977, %v704
        %v979 = vpop.permute.xlu0 %978
        %982 = vset.pattern.permute.xlu0 0
        %983 = vperm.xlu0 %982, %v706
        %v984 = vpop.permute.xlu0 %983
        %987 = vset.pattern.permute.xlu0 0
        %988 = vperm.xlu0 %987, %v708
        %v989 = vpop.permute.xlu0 %988
        %992 = vset.pattern.permute.xlu0 0
        %993 = vperm.xlu0 %992, %v710
        %v994 = vpop.permute.xlu0 %993
        %997 = vset.pattern.permute.xlu0 0
        %998 = vperm.xlu0 %997, %v712
        %v999 = vpop.permute.xlu0 %998
        %1002 = vset.pattern.permute.xlu0 0
        %1003 = vperm.xlu0 %1002, %v714
        %v1004 = vpop.permute.xlu0 %1003
        %1007 = vset.pattern.permute.xlu0 0
        %1008 = vperm.xlu0 %1007, %v716
        %v1009 = vpop.permute.xlu0 %1008
        %1012 = vset.pattern.permute.xlu0 0
        %1013 = vperm.xlu0 %1012, %v718
        %v1014 = vpop.permute.xlu0 %1013
        %1017 = vset.pattern.permute.xlu0 0
        %1018 = vperm.xlu0 %1017, %v720
        %v1019 = vpop.permute.xlu0 %1018
        %1022 = vset.pattern.permute.xlu0 0
        %1023 = vperm.xlu0 %1022, %v722
        %v1024 = vpop.permute.xlu0 %1023
        %1027 = vset.pattern.permute.xlu0 0
        %1028 = vperm.xlu0 %1027, %v724
        %v1029 = vpop.permute.xlu0 %1028
        %1032 = vset.pattern.permute.xlu0 0
        %1033 = vperm.xlu0 %1032, %v726
        %v1034 = vpop.permute.xlu0 %1033
        %1037 = vset.pattern.permute.xlu0 0
        %1038 = vperm.xlu0 %1037, %v728
        %v1039 = vpop.permute.xlu0 %1038
        %1042 = vset.pattern.permute.xlu0 0
        %1043 = vperm.xlu0 %1042, %v730
        %v1044 = vpop.permute.xlu0 %1043
        %1047 = vset.pattern.permute.xlu0 0
        %1048 = vperm.xlu0 %1047, %v732
        %v1049 = vpop.permute.xlu0 %1048
        %1052 = vset.pattern.permute.xlu0 0
        %1053 = vperm.xlu0 %1052, %v734
        %v1054 = vpop.permute.xlu0 %1053
        %v1056 = vmul.f32 %v979, %v960
        %v1057 = vmul.f32 %v984, %v961
        %v1058 = vmul.f32 %v989, %v962
        %v1059 = vmul.f32 %v994, %v963
        %v1060 = vmul.f32 %v999, %v964
        %v1061 = vmul.f32 %v1004, %v965
        %v1062 = vmul.f32 %v1009, %v966
        %v1063 = vmul.f32 %v1014, %v967
        %v1064 = vmul.f32 %v1019, %v968
        %v1065 = vmul.f32 %v1024, %v969
        %v1066 = vmul.f32 %v1029, %v970
        %v1067 = vmul.f32 %v1034, %v971
        %v1068 = vmul.f32 %v1039, %v972
        %v1069 = vmul.f32 %v1044, %v973
        %v1070 = vmul.f32 %v1049, %v974
        %v1071 = vmul.f32 %v1054, %v975
        %v1072 = vpack.c.bf16 %v834, %v832
        %v1073 = vpack.c.bf16 %v838, %v836
        %v1074 = vpack.c.bf16 %v842, %v840
        %v1075 = vpack.c.bf16 %v846, %v844
        %v1076 = vpack.c.bf16 %v850, %v848
        %v1077 = vpack.c.bf16 %v854, %v852
        %v1078 = vpack.c.bf16 %v858, %v856
        %v1079 = vpack.c.bf16 %v862, %v860
        %v1096 = vunpack.c.l.b16 %v365
        %v1097 = vunpack.c.l.b16 %v366
        %v1098 = vunpack.c.l.b16 %v367
        %v1099 = vunpack.c.l.b16 %v368
        %v1100 = vunpack.c.l.b16 %v369
        %v1101 = vunpack.c.l.b16 %v370
        %v1102 = vunpack.c.l.b16 %v371
        %v1103 = vunpack.c.l.b16 %v372
        %v1104 = vunpack.c.l.b16 %v373
        %v1105 = vunpack.c.l.b16 %v374
        %v1106 = vunpack.c.l.b16 %v375
        %v1107 = vunpack.c.l.b16 %v376
        %v1108 = vunpack.c.l.b16 %v377
        %v1109 = vunpack.c.l.b16 %v378
        %v1110 = vunpack.c.l.b16 %v379
        %v1111 = vunpack.c.l.b16 %v380
        %v1112 = vpack.c.b16 %v1097, %v1096
        %v1113 = vpack.c.b16 %v1099, %v1098
        %v1114 = vpack.c.b16 %v1101, %v1100
        %v1115 = vpack.c.b16 %v1103, %v1102
        %v1116 = vpack.c.b16 %v1105, %v1104
        %v1117 = vpack.c.b16 %v1107, %v1106
        %v1118 = vpack.c.b16 %v1109, %v1108
        %v1119 = vpack.c.b16 %v1111, %v1110
        %1128 = vmatprep.subr.bf16.mxu0 0
        %1129 = vmatpush1.bf16.msra.mxu0 %v1119
        %1130 = vmatprep.subr.bf16.mxu0 0
        %1131 = vmatpush1.bf16.msra.mxu0 %v1118
        %1132 = vmatprep.subr.bf16.mxu0 0
        %1133 = vmatpush1.bf16.msra.mxu0 %v1117
        %1134 = vmatprep.subr.bf16.mxu0 0
        %1135 = vmatpush1.bf16.msra.mxu0 %v1116
        %1136 = vmatprep.subr.bf16.mxu0 0
        %1137 = vmatpush1.bf16.msra.mxu0 %v1115
        %1138 = vmatprep.subr.bf16.mxu0 0
        %1139 = vmatpush1.bf16.msra.mxu0 %v1114
        %1140 = vmatprep.subr.bf16.mxu0 0
        %1141 = vmatpush1.bf16.msra.mxu0 %v1113
        %1142 = vmatprep.subr.bf16.mxu0 0
        %1143 = vmatpush1.bf16.msra.mxu0 %v1112
        %1144 = vmatprep.subr.bf16.mxu0 0
        %1145 = vmatpush2.bf16.msra.mxu0 0
        %1146 = vmatprep.subr.bf16.mxu0 0
        %1147 = vmatpush2.bf16.msra.mxu0 0
        %1148 = vmatprep.subr.bf16.mxu0 0
        %1149 = vmatpush2.bf16.msra.mxu0 0
        %1150 = vmatprep.subr.bf16.mxu0 0
        %1151 = vmatpush2.bf16.msra.mxu0 0
        %1152 = vmatprep.subr.bf16.mxu0 0
        %1153 = vmatpush2.bf16.msra.mxu0 0
        %1154 = vmatprep.subr.bf16.mxu0 0
        %1155 = vmatpush2.bf16.msra.mxu0 0
        %1156 = vmatprep.subr.bf16.mxu0 0
        %1157 = vmatpush2.bf16.msra.mxu0 0
        %1158 = vmatprep.subr.bf16.mxu0 0
        %1159 = vmatpush2.bf16.msra.mxu0 0
        %1160 = vmatprep.mubr.bf16.mxu0 0
        %1161 = vmatmul.mubr.bf16.gmra.mxu0 %v1072
        %v1162 = vpop.f32.mrf.mxu0
        %v1163 = vadd.f32 0.0, %v1162
        %v1164 = vpop.f32.mrf.mxu0
        %v1165 = vpop.f32.mrf.mxu0
        %v1166 = vadd.f32 0.0, %v1165
        %v1167 = vpop.f32.mrf.mxu0
        %1168 = vmatprep.mubr.bf16.mxu0 0
        %1169 = vmatmul.mubr.bf16.gmra.mxu0 %v1073
        %v1170 = vpop.f32.mrf.mxu0
        %v1171 = vadd.f32 0.0, %v1170
        %v1172 = vpop.f32.mrf.mxu0
        %v1173 = vpop.f32.mrf.mxu0
        %v1174 = vadd.f32 0.0, %v1173
        %v1175 = vpop.f32.mrf.mxu0
        %1176 = vmatprep.mubr.bf16.mxu0 0
        %1177 = vmatmul.mubr.bf16.gmra.mxu0 %v1074
        %v1178 = vpop.f32.mrf.mxu0
        %v1179 = vadd.f32 0.0, %v1178
        %v1180 = vpop.f32.mrf.mxu0
        %v1181 = vpop.f32.mrf.mxu0
        %v1182 = vadd.f32 0.0, %v1181
        %v1183 = vpop.f32.mrf.mxu0
        %1184 = vmatprep.mubr.bf16.mxu0 0
        %1185 = vmatmul.mubr.bf16.gmra.mxu0 %v1075
        %v1186 = vpop.f32.mrf.mxu0
        %v1187 = vadd.f32 0.0, %v1186
        %v1188 = vpop.f32.mrf.mxu0
        %v1189 = vpop.f32.mrf.mxu0
        %v1190 = vadd.f32 0.0, %v1189
        %v1191 = vpop.f32.mrf.mxu0
        %1192 = vmatprep.mubr.bf16.mxu0 0
        %1193 = vmatmul.mubr.bf16.gmra.mxu0 %v1076
        %v1194 = vpop.f32.mrf.mxu0
        %v1195 = vadd.f32 0.0, %v1194
        %v1196 = vpop.f32.mrf.mxu0
        %v1197 = vpop.f32.mrf.mxu0
        %v1198 = vadd.f32 0.0, %v1197
        %v1199 = vpop.f32.mrf.mxu0
        %1200 = vmatprep.mubr.bf16.mxu0 0
        %1201 = vmatmul.mubr.bf16.gmra.mxu0 %v1077
        %v1202 = vpop.f32.mrf.mxu0
        %v1203 = vadd.f32 0.0, %v1202
        %v1204 = vpop.f32.mrf.mxu0
        %v1205 = vpop.f32.mrf.mxu0
        %v1206 = vadd.f32 0.0, %v1205
        %v1207 = vpop.f32.mrf.mxu0
        %1208 = vmatprep.mubr.bf16.mxu0 0
        %1209 = vmatmul.mubr.bf16.gmra.mxu0 %v1078
        %v1210 = vpop.f32.mrf.mxu0
        %v1211 = vadd.f32 0.0, %v1210
        %v1212 = vpop.f32.mrf.mxu0
        %v1213 = vpop.f32.mrf.mxu0
        %v1214 = vadd.f32 0.0, %v1213
        %v1215 = vpop.f32.mrf.mxu0
        %1216 = vmatprep.mubr.bf16.mxu0 0
        %1217 = vmatmul.mubr.bf16.gmra.mxu0 %v1079
        %v1218 = vpop.f32.mrf.mxu0
        %v1219 = vadd.f32 0.0, %v1218
        %v1220 = vpop.f32.mrf.mxu0
        %v1221 = vpop.f32.mrf.mxu0
        %v1222 = vadd.f32 0.0, %v1221
        %v1223 = vpop.f32.mrf.mxu0
        %1224 = vdwg.mxu0
        %v1225 = vadd.f32 %v1056, %v1163
        %v1226 = vadd.f32 %v1057, %v1166
        %v1227 = vadd.f32 %v1058, %v1171
        %v1228 = vadd.f32 %v1059, %v1174
        %v1229 = vadd.f32 %v1060, %v1179
        %v1230 = vadd.f32 %v1061, %v1182
        %v1231 = vadd.f32 %v1062, %v1187
        %v1232 = vadd.f32 %v1063, %v1190
        %v1233 = vadd.f32 %v1064, %v1195
        %v1234 = vadd.f32 %v1065, %v1198
        %v1235 = vadd.f32 %v1066, %v1203
        %v1236 = vadd.f32 %v1067, %v1206
        %v1237 = vadd.f32 %v1068, %v1211
        %v1238 = vadd.f32 %v1069, %v1214
        %v1239 = vadd.f32 %v1070, %v1219
        %v1240 = vadd.f32 %v1071, %v1222
        %vm1241 = vcmask 130048
        %1242 = vst.msk [vmem:[#allocation4] sm:$0xff] %vm1241, %v1225
        %1243 = vst.msk [vmem:[#allocation4 + $0x8] sm:$0xff] %vm1241, %v1226
        %1244 = vst.msk [vmem:[#allocation4 + $0x10] sm:$0xff] %vm1241, %v1227
        %1245 = vst.msk [vmem:[#allocation4 + $0x18] sm:$0xff] %vm1241, %v1228
        %1246 = vst.msk [vmem:[#allocation4 + $0x20] sm:$0xff] %vm1241, %v1229
        %1247 = vst.msk [vmem:[#allocation4 + $0x28] sm:$0xff] %vm1241, %v1230
        %1248 = vst.msk [vmem:[#allocation4 + $0x30] sm:$0xff] %vm1241, %v1231
        %1249 = vst.msk [vmem:[#allocation4 + $0x38] sm:$0xff] %vm1241, %v1232
        %1250 = vst.msk [vmem:[#allocation4 + $0x40] sm:$0xff] %vm1241, %v1233
        %1251 = vst.msk [vmem:[#allocation4 + $0x48] sm:$0xff] %vm1241, %v1234
        %1252 = vst.msk [vmem:[#allocation4 + $0x50] sm:$0xff] %vm1241, %v1235
        %1253 = vst.msk [vmem:[#allocation4 + $0x58] sm:$0xff] %vm1241, %v1236
        %1254 = vst.msk [vmem:[#allocation4 + $0x60] sm:$0xff] %vm1241, %v1237
        %1255 = vst.msk [vmem:[#allocation4 + $0x68] sm:$0xff] %vm1241, %v1238
        %1256 = vst.msk [vmem:[#allocation4 + $0x70] sm:$0xff] %vm1241, %v1239
        %1257 = vst.msk [vmem:[#allocation4 + $0x78] sm:$0xff] %vm1241, %v1240
        %1258 = vst.msk [vmem:[#allocation2] sm:$0xff] %vm943, %v671
        %1259 = vst.msk [vmem:[#allocation2 + $0x8] sm:$0xff] %vm943, %v672
        %1260 = vst.msk [vmem:[#allocation2 + $0x10] sm:$0xff] %vm943, %v673
        %1261 = vst.msk [vmem:[#allocation2 + $0x18] sm:$0xff] %vm943, %v674
        %1262 = vst.msk [vmem:[#allocation2 + $0x20] sm:$0xff] %vm943, %v675
        %1263 = vst.msk [vmem:[#allocation2 + $0x28] sm:$0xff] %vm943, %v676
        %1264 = vst.msk [vmem:[#allocation2 + $0x30] sm:$0xff] %vm943, %v677
        %1265 = vst.msk [vmem:[#allocation2 + $0x38] sm:$0xff] %vm943, %v678
        %1266 = vst.msk [vmem:[#allocation2 + $0x40] sm:$0xff] %vm943, %v679
        %1267 = vst.msk [vmem:[#allocation2 + $0x48] sm:$0xff] %vm943, %v680
        %1268 = vst.msk [vmem:[#allocation2 + $0x50] sm:$0xff] %vm943, %v681
        %1269 = vst.msk [vmem:[#allocation2 + $0x58] sm:$0xff] %vm943, %v682
        %1270 = vst.msk [vmem:[#allocation2 + $0x60] sm:$0xff] %vm943, %v683
        %1271 = vst.msk [vmem:[#allocation2 + $0x68] sm:$0xff] %vm943, %v684
        %1272 = vst.msk [vmem:[#allocation2 + $0x70] sm:$0xff] %vm943, %v685
        %1273 = vst.msk [vmem:[#allocation2 + $0x78] sm:$0xff] %vm943, %v686
        %p1274 = scmp.eq.s32.totalorder %s24, 1
        // Predicated region
        $region37: #{tpu_custom_call.1} parent=31 // pred_check
          %p1275 = pneg %p1274
        $region38: #{tpu_custom_call.1} parent=31 // pred_check_branch
          %1277 = sbr.rel (%p1275) target = $region40
        $region39: #{tpu_custom_call.1} parent=31 // pred_region
          %v1278 = vld [vmem:[#allocation3] sm:$0xff]
          %v1279 = vld [vmem:[#allocation3 + $0x8] sm:$0xff]
          %v1280 = vld [vmem:[#allocation3 + $0x10] sm:$0xff]
          %v1281 = vld [vmem:[#allocation3 + $0x18] sm:$0xff]
          %v1282 = vld [vmem:[#allocation3 + $0x20] sm:$0xff]
          %v1283 = vld [vmem:[#allocation3 + $0x28] sm:$0xff]
          %v1284 = vld [vmem:[#allocation3 + $0x30] sm:$0xff]
          %v1285 = vld [vmem:[#allocation3 + $0x38] sm:$0xff]
          %v1286 = vld [vmem:[#allocation3 + $0x40] sm:$0xff]
          %v1287 = vld [vmem:[#allocation3 + $0x48] sm:$0xff]
          %v1288 = vld [vmem:[#allocation3 + $0x50] sm:$0xff]
          %v1289 = vld [vmem:[#allocation3 + $0x58] sm:$0xff]
          %v1290 = vld [vmem:[#allocation3 + $0x60] sm:$0xff]
          %v1291 = vld [vmem:[#allocation3 + $0x68] sm:$0xff]
          %v1292 = vld [vmem:[#allocation3 + $0x70] sm:$0xff]
          %v1293 = vld [vmem:[#allocation3 + $0x78] sm:$0xff]
          %v1294 = vrcp.pop %v1278
          %v1295 = vrcp.pop %v1279
          %v1296 = vrcp.pop %v1280
          %v1297 = vrcp.pop %v1281
          %v1298 = vrcp.pop %v1282
          %v1299 = vrcp.pop %v1283
          %v1300 = vrcp.pop %v1284
          %v1301 = vrcp.pop %v1285
          %v1302 = vrcp.pop %v1286
          %v1303 = vrcp.pop %v1287
          %v1304 = vrcp.pop %v1288
          %v1305 = vrcp.pop %v1289
          %v1306 = vrcp.pop %v1290
          %v1307 = vrcp.pop %v1291
          %v1308 = vrcp.pop %v1292
          %v1309 = vrcp.pop %v1293
          %v1310 = vld [vmem:[#allocation4] sm:$0xff]
          %v1311 = vld [vmem:[#allocation4 + $0x8] sm:$0xff]
          %v1312 = vld [vmem:[#allocation4 + $0x10] sm:$0xff]
          %v1313 = vld [vmem:[#allocation4 + $0x18] sm:$0xff]
          %v1314 = vld [vmem:[#allocation4 + $0x20] sm:$0xff]
          %v1315 = vld [vmem:[#allocation4 + $0x28] sm:$0xff]
          %v1316 = vld [vmem:[#allocation4 + $0x30] sm:$0xff]
          %v1317 = vld [vmem:[#allocation4 + $0x38] sm:$0xff]
          %v1318 = vld [vmem:[#allocation4 + $0x40] sm:$0xff]
          %v1319 = vld [vmem:[#allocation4 + $0x48] sm:$0xff]
          %v1320 = vld [vmem:[#allocation4 + $0x50] sm:$0xff]
          %v1321 = vld [vmem:[#allocation4 + $0x58] sm:$0xff]
          %v1322 = vld [vmem:[#allocation4 + $0x60] sm:$0xff]
          %v1323 = vld [vmem:[#allocation4 + $0x68] sm:$0xff]
          %v1324 = vld [vmem:[#allocation4 + $0x70] sm:$0xff]
          %v1325 = vld [vmem:[#allocation4 + $0x78] sm:$0xff]
          %1327 = vset.pattern.permute.xlu0 0
          %1328 = vperm.xlu0 %1327, %v1294
          %v1329 = vpop.permute.xlu0 %1328
          %1332 = vset.pattern.permute.xlu0 0
          %1333 = vperm.xlu0 %1332, %v1295
          %v1334 = vpop.permute.xlu0 %1333
          %1337 = vset.pattern.permute.xlu0 0
          %1338 = vperm.xlu0 %1337, %v1296
          %v1339 = vpop.permute.xlu0 %1338
          %1342 = vset.pattern.permute.xlu0 0
          %1343 = vperm.xlu0 %1342, %v1297
          %v1344 = vpop.permute.xlu0 %1343
          %1347 = vset.pattern.permute.xlu0 0
          %1348 = vperm.xlu0 %1347, %v1298
          %v1349 = vpop.permute.xlu0 %1348
          %1352 = vset.pattern.permute.xlu0 0
          %1353 = vperm.xlu0 %1352, %v1299
          %v1354 = vpop.permute.xlu0 %1353
          %1357 = vset.pattern.permute.xlu0 0
          %1358 = vperm.xlu0 %1357, %v1300
          %v1359 = vpop.permute.xlu0 %1358
          %1362 = vset.pattern.permute.xlu0 0
          %1363 = vperm.xlu0 %1362, %v1301
          %v1364 = vpop.permute.xlu0 %1363
          %1367 = vset.pattern.permute.xlu0 0
          %1368 = vperm.xlu0 %1367, %v1302
          %v1369 = vpop.permute.xlu0 %1368
          %1372 = vset.pattern.permute.xlu0 0
          %1373 = vperm.xlu0 %1372, %v1303
          %v1374 = vpop.permute.xlu0 %1373
          %1377 = vset.pattern.permute.xlu0 0
          %1378 = vperm.xlu0 %1377, %v1304
          %v1379 = vpop.permute.xlu0 %1378
          %1382 = vset.pattern.permute.xlu0 0
          %1383 = vperm.xlu0 %1382, %v1305
          %v1384 = vpop.permute.xlu0 %1383
          %1387 = vset.pattern.permute.xlu0 0
          %1388 = vperm.xlu0 %1387, %v1306
          %v1389 = vpop.permute.xlu0 %1388
          %1392 = vset.pattern.permute.xlu0 0
          %1393 = vperm.xlu0 %1392, %v1307
          %v1394 = vpop.permute.xlu0 %1393
          %1397 = vset.pattern.permute.xlu0 0
          %1398 = vperm.xlu0 %1397, %v1308
          %v1399 = vpop.permute.xlu0 %1398
          %1402 = vset.pattern.permute.xlu0 0
          %1403 = vperm.xlu0 %1402, %v1309
          %v1404 = vpop.permute.xlu0 %1403
          %v1406 = vmul.f32 %v1310, %v1329
          %v1407 = vmul.f32 %v1311, %v1334
          %v1408 = vmul.f32 %v1312, %v1339
          %v1409 = vmul.f32 %v1313, %v1344
          %v1410 = vmul.f32 %v1314, %v1349
          %v1411 = vmul.f32 %v1315, %v1354
          %v1412 = vmul.f32 %v1316, %v1359
          %v1413 = vmul.f32 %v1317, %v1364
          %v1414 = vmul.f32 %v1318, %v1369
          %v1415 = vmul.f32 %v1319, %v1374
          %v1416 = vmul.f32 %v1320, %v1379
          %v1417 = vmul.f32 %v1321, %v1384
          %v1418 = vmul.f32 %v1322, %v1389
          %v1419 = vmul.f32 %v1323, %v1394
          %v1420 = vmul.f32 %v1324, %v1399
          %v1421 = vmul.f32 %v1325, %v1404
          %1422 = vxpose.xlu0.b32.start [1/16] %v1406, 128
          %1423 = vxpose.xlu0.b32.cont [2/16] %v1407, 128
          %1424 = vxpose.xlu0.b32.cont [3/16] %v1408, 128
          %1425 = vxpose.xlu0.b32.cont [4/16] %v1409, 128
          %1426 = vxpose.xlu0.b32.cont [5/16] %v1410, 128
          %1427 = vxpose.xlu0.b32.cont [6/16] %v1411, 128
          %1428 = vxpose.xlu0.b32.cont [7/16] %v1412, 128
          %1429 = vxpose.xlu0.b32.cont [8/16] %v1413, 128
          %1430 = vxpose.xlu0.b32.cont [9/16] %v1414, 128
          %1431 = vxpose.xlu0.b32.cont [10/16] %v1415, 128
          %1432 = vxpose.xlu0.b32.cont [11/16] %v1416, 128
          %1433 = vxpose.xlu0.b32.cont [12/16] %v1417, 128
          %1434 = vxpose.xlu0.b32.cont [13/16] %v1418, 128
          %1435 = vxpose.xlu0.b32.cont [14/16] %v1419, 128
          %1436 = vxpose.xlu0.b32.cont [15/16] %v1420, 128
          %1437 = vxpose.xlu0.b32.end [16/16] %v1421, 128
          %v1438 = vpop.trf.xlu0
          %v1439 = vpop.trf.xlu0
          %v1440 = vpop.trf.xlu0
          %v1441 = vpop.trf.xlu0
          %v1442 = vpop.trf.xlu0
          %v1443 = vpop.trf.xlu0
          %v1444 = vpop.trf.xlu0
          %v1445 = vpop.trf.xlu0
          %v1446 = vpop.trf.xlu0
          %v1447 = vpop.trf.xlu0
          %v1448 = vpop.trf.xlu0
          %v1449 = vpop.trf.xlu0
          %v1450 = vpop.trf.xlu0
          %v1451 = vpop.trf.xlu0
          %v1452 = vpop.trf.xlu0
          %v1453 = vpop.trf.xlu0
          %1454 = vst [vmem:[%s247] sm:$0xff] %v1438
          %1455 = vst [vmem:[%s247 + $0x8] sm:$0xff] %v1439
        $region40: #{tpu_custom_call.1} parent=31 // pred_fallthru
          _
        %s1456 = sand.u32 %s130, 1
        %s1457 = scalar_lea.sflag [#allocation6], %s1456
        %s1458 = sand.u32 %s130, 1
        %s1459 = smul.addr %s1458, 16
        %s1460 = scalar_lea.vmem [#allocation5], %s1459
        // Predicated region
        $region41: #{tpu_custom_call.1} parent=31 // pred_check
          %p1461 = pneg %p140
        $region42: #{tpu_custom_call.1} parent=31 // pred_check_branch
          %1463 = sbr.rel (%p1461) target = $region44
        $region43: #{tpu_custom_call.1} parent=31 // pred_region
          %s1465 = ssub.s32 256, 256
          %1466 = vsyncadd %s1457, %s1465
          %s1467 = smul.addr %s22, 4
          %s1468 = sadd.s32 %s23, %s1467
          %s1469 = smul.addr %s1468, 128
          %s1470 = scalar_lea.hbm %s3, %s1469
          %s1471 = sshll.u32 %s1460, 4
          %s1472 = int_to_ptr.vmem [resolvable:$true] %s1471
          %1477 = dma.vmem_to_hbm [thread:$0]  %s1472, 256, %s1470, %s1457, 128, 256, 8
        $region44: #{tpu_custom_call.1} parent=31 // pred_fallthru
          _
      $region32: #{tpu_custom_call.1} parent=5 // pred_fallthru
        _
      %p1478 = scmp.le.s32.totalorder 2, %s12
      // Predicated region
      $region45: #{tpu_custom_call.1} parent=5 // pred_check
        %p1479 = pneg %p1478
      $region46: #{tpu_custom_call.1} parent=5 // pred_check_branch
        %1481 = sbr.rel (%p1479) target = $region48
      $region47: #{tpu_custom_call.1} parent=5 // pred_region
        %s1482 = ssub.s32 %s12, 2
        // Predicated region
        $region49: #{tpu_custom_call.1} parent=47 // pred_check
          %p1483 = pneg %p146
        $region50: #{tpu_custom_call.1} parent=47 // pred_check_branch
          %1485 = sbr.rel (%p1483) target = $region52
        $region51: #{tpu_custom_call.1} parent=47 // pred_region
          %s1486 = sand.u32 %s131, 1
          %s1487 = scalar_lea.sflag [#allocation6], %s1486
          %s1488 = sand.u32 %s131, 1
          %s1489 = smul.addr %s1488, 16
          %s1490 = scalar_lea.vmem [#allocation5], %s1489
          %1491 = dma.done %s1487, 256
        $region52: #{tpu_custom_call.1} parent=47 // pred_fallthru
          _
      $region48: #{tpu_custom_call.1} parent=5 // pred_fallthru
        _
    $region6: #{tpu_custom_call.1} parent=1 // loop_footer
      %s16 = sadd.s32 1, %s12
    $region7: #{tpu_custom_call.1} parent=1 // loop_footer_branch
      %11 = sbr.rel target = $region3
    $region8: #{tpu_custom_call.1} parent=1 // loop_exit
      _
    %1492 = vsyncpa [#allocation6], 1
    %s1493 = scalar_lea.sflag [#allocation6], 1
    %1494 = vsyncpa %s1493, 1

</llo_original>
